<compile_context>
chip_gen: v6e
topology: v6e:2x2x1
jax: 0.10.0
libtpu: 0.0.40
codegen_flags: <defaults>
</compile_context>

<pallas_src>
import functools

import jax
import jax.numpy as jnp
from jax.experimental import pallas as pl
from jax.experimental.pallas import tpu as pltpu


def _round_up(x, m):
    return (x + m - 1) // m * m


# ----------------------------------------------------------------------------
# Pallas kernel: all GCN layers fused, grid = (layer, node_row_tile)
# ----------------------------------------------------------------------------
def _fused_gcn_kernel(a_ref, x_ref, w_ref, b_ref, o_ref, h_a, h_b,
                      *, num_layers, tile_m, feat_pad, out_dim, a_resident):
    l = pl.program_id(0)                       # layer index (sequential dep)
    i = pl.program_id(1)                       # node row-tile index
    row0 = pl.multiple_of(i * tile_m, tile_m)  # aligned row offset

    # Row tile of A_hat: either sliced out of the fully-resident adjacency or
    # streamed in per grid step (statically chosen at trace time).
    if a_resident:
        a_tile = a_ref[pl.ds(row0, tile_m), :]     # (TM, Np)
    else:
        a_tile = a_ref[...]                        # (TM, Np)

    # Static unroll over layers: each pl.when branch uses statically chosen
    # src/dst refs (no dynamic indexing of scratch buffers).
    for layer in range(num_layers):
        if layer == 0:
            src = x_ref                            # resident padded features
        else:
            src = h_a if (layer - 1) % 2 == 0 else h_b
        dst = h_a if layer % 2 == 0 else h_b
        is_last = layer == num_layers - 1

        @pl.when(l == layer)
        def _(src=src, dst=dst, is_last=is_last):
            # (A_row_tile @ H) in bf16 on the MXU with f32 accumulation.
            t = jnp.dot(a_tile, src[...],
                        preferred_element_type=jnp.float32)      # (TM, Fp)
            # Small feature-mixing matmul + bias in f32.
            z = jnp.dot(t, w_ref[...],
                        preferred_element_type=jnp.float32)      # (TM, Fp)
            z = z + b_ref[...]

            if not is_last:
                # ReLU in f32; hidden activations stored as bf16.
                # (Dropout is identity in eval mode.)
                dst[pl.ds(row0, tile_m), :] = (
                    jnp.maximum(z, 0.0).astype(dst.dtype))
            else:
                # log_softmax over the valid (un-padded) feature lanes only.
                col = jax.lax.broadcasted_iota(jnp.int32, (tile_m, feat_pad), 1)
                valid = col < out_dim
                zm = jnp.where(valid, z, -1e30)
                m = jnp.max(zm, axis=-1, keepdims=True)
                e = jnp.where(valid, jnp.exp(zm - m), 0.0)
                lse = jnp.log(jnp.sum(e, axis=-1, keepdims=True))
                o_ref[...] = (z - m - lse).astype(o_ref.dtype)


# ----------------------------------------------------------------------------
# Wrapper: padding, stacking per-layer params, pallas_call
# ----------------------------------------------------------------------------
def gcn_forward(params, x, a_hat):
    ws = [params["w1"], params["w2"], params["w3"], params["w4"]]
    bs = [params["b1"], params["b2"], params["b3"], params["b4"]]
    num_layers = len(ws)

    n, in_dim = x.shape
    out_dim = ws[-1].shape[1]

    # Lane-dense feature padding (same width for all layers) and row tiling.
    feat_pad = _round_up(max([in_dim] + [w.shape[1] for w in ws]), 128)
    tile_m = 128
    n_pad = _round_up(n, tile_m)
    num_tiles = n_pad // tile_m

    # Pad + cast: A_hat and X go to bf16 (the N^2 matmul driver); weights and
    # biases stay f32 for the small matmul / epilogue.
    a_p = jnp.zeros((n_pad, n_pad), jnp.float32).at[:n, :n].set(a_hat)
    a_p = a_p.astype(jnp.bfloat16)
    x_p = jnp.zeros((n_pad, feat_pad), jnp.float32).at[:n, :in_dim].set(x)
    x_p = x_p.astype(jnp.bfloat16)

    w_stack = jnp.stack([
        jnp.zeros((feat_pad, feat_pad), jnp.float32)
        .at[:w.shape[0], :w.shape[1]].set(w)
        for w in ws])                                        # (L, Fp, Fp)
    b_stack = jnp.stack([
        jnp.zeros((1, feat_pad), jnp.float32)
        .at[:, :b.shape[-1]].set(b.reshape(1, -1))
        for b in bs])                                        # (L, 1, Fp)

    # VMEM budget (conservative: every input BlockSpec double-buffered).
    base_est = (2 * n_pad * feat_pad * 2        # X (bf16, resident) x2
                + 2 * n_pad * feat_pad * 2      # h_a + h_b scratch (bf16)
                + 2 * feat_pad * feat_pad * 4   # W block x2
                + 2 * feat_pad * 4              # b block x2
                + 2 * tile_m * feat_pad * 4)    # output block x2
    resident_a_bytes = 2 * n_pad * n_pad * 2    # whole A_hat (bf16) x2
    streamed_a_bytes = 2 * tile_m * n_pad * 2   # A_hat row tile (bf16) x2

    # Keep A_hat fully resident (fetched once) when it fits comfortably; this
    # cuts adjacency HBM traffic from num_layers*num_tiles fetches to one.
    a_resident = (base_est + resident_a_bytes) <= (40 << 20)
    est = base_est + (resident_a_bytes if a_resident else streamed_a_bytes)
    vmem_limit = int(min(max(est + (8 << 20), 16 << 20), 48 << 20))

    if a_resident:
        a_spec = pl.BlockSpec((n_pad, n_pad), lambda l, i: (0, 0))
    else:
        a_spec = pl.BlockSpec((tile_m, n_pad), lambda l, i: (i, 0))

    kernel = functools.partial(
        _fused_gcn_kernel,
        num_layers=num_layers, tile_m=tile_m,
        feat_pad=feat_pad, out_dim=out_dim, a_resident=a_resident)

    out_p = pl.pallas_call(
        kernel,
        out_shape=jax.ShapeDtypeStruct((n_pad, feat_pad), jnp.float32),
        grid_spec=pltpu.PrefetchScalarGridSpec(
            num_scalar_prefetch=0,
            grid=(num_layers, num_tiles),
            in_specs=[
                a_spec,                                                    # A_hat
                pl.BlockSpec((n_pad, feat_pad), lambda l, i: (0, 0)),      # X (resident)
                pl.BlockSpec((None, feat_pad, feat_pad),
                             lambda l, i: (l, 0, 0)),                      # W_l
                pl.BlockSpec((None, 1, feat_pad), lambda l, i: (l, 0, 0)), # b_l
            ],
            out_specs=pl.BlockSpec((tile_m, feat_pad), lambda l, i: (i, 0)),
            scratch_shapes=[
                pltpu.VMEM((n_pad, feat_pad), jnp.bfloat16),   # H ping
                pltpu.VMEM((n_pad, feat_pad), jnp.bfloat16),   # H pong
            ],
        ),
        compiler_params=pltpu.CompilerParams(
            # Both axes sequential: layers are a hard dependency and row tiles
            # share the resident H scratch (per-core VMEM under megacore).
            dimension_semantics=("arbitrary", "arbitrary"),
            vmem_limit_bytes=vmem_limit,
        ),
    )(a_p, x_p, w_stack, b_stack)

    return out_p[:n, :out_dim]


# ----------------------------------------------------------------------------
# Glue: GCN normalization (plain JAX), matching PyG gcn_norm semantics:
# scatter-add of parallel edges, self-loop weight forced to 1
# (add_remaining_self_loops with unit edge weights), then
# A_hat = D^{-1/2} A D^{-1/2} with D = diag(row-sum of A).
# ----------------------------------------------------------------------------
def build_normalized_adjacency(edge_index, num_nodes):
    src, dst = edge_index[0], edge_index[1]
    a = jnp.zeros((num_nodes, num_nodes), dtype=jnp.float32)
    a = a.at[dst, src].add(1.0)                         # duplicate edges sum
    eye = jnp.eye(num_nodes, dtype=jnp.float32)
    a = a * (1.0 - eye) + eye                           # self-loops -> weight 1
    deg = jnp.sum(a, axis=1)
    d_inv_sqrt = jnp.where(deg > 0, 1.0 / jnp.sqrt(deg), 0.0)
    return a * d_inv_sqrt[:, None] * d_inv_sqrt[None, :]


def init_params(key, in_dim, hidden, out_dim):
    ks = jax.random.split(key, 4)

    def glorot(k, fan_in, fan_out):
        limit = jnp.sqrt(6.0 / (fan_in + fan_out))
        return jax.random.uniform(k, (fan_in, fan_out), jnp.float32, -limit, limit)

    return {
        "w1": glorot(ks[0], in_dim, hidden), "b1": jnp.zeros((hidden,), jnp.float32),
        "w2": glorot(ks[1], hidden, hidden), "b2": jnp.zeros((hidden,), jnp.float32),
        "w3": glorot(ks[2], hidden, hidden), "b3": jnp.zeros((hidden,), jnp.float32),
        "w4": glorot(ks[3], hidden, out_dim), "b4": jnp.zeros((out_dim,), jnp.float32),
    }


if __name__ == "__main__":
    key = jax.random.PRNGKey(0)
    k_x, k_e, k_p = jax.random.split(key, 3)

    # small synthetic graph consistent with the module's forward
    num_nodes = 32
    in_dim, hidden, out_dim = 16, 32, 8
    num_edges = 64

    x = jax.random.normal(k_x, (num_nodes, in_dim), dtype=jnp.float32)
    edge_index = jax.random.randint(k_e, (2, num_edges), 0, num_nodes, dtype=jnp.int32)
    a_hat = build_normalized_adjacency(edge_index, num_nodes)

    params = init_params(k_p, in_dim, hidden, out_dim)

    out = jax.jit(gcn_forward)(params, x, a_hat)
    out = jax.block_until_ready(out)

    assert out.shape == (num_nodes, out_dim)
    assert bool(jnp.all(jnp.isfinite(out)))
    # rows of log_softmax should exponentiate-sum to ~1
    assert jnp.allclose(jnp.sum(jnp.exp(out), axis=1), 1.0, atol=2e-3)
    print("KERNEL_OK")
</pallas_src>

<mosaic_0001>
module attributes {stable_mosaic.version = 11 : i64} {
  func.func @_fused_gcn_kernel(%arg0: i32, %arg1: i32, %arg2: memref<128x128xbf16, #tpu.memory_space<vmem>>, %arg3: memref<128x128xbf16, #tpu.memory_space<vmem>>, %arg4: memref<1x128x128xf32, #tpu.memory_space<vmem>>, %arg5: memref<1x1x128xf32, #tpu.memory_space<vmem>>, %arg6: memref<128x128xf32, #tpu.memory_space<vmem>>, %arg7: memref<128x128xbf16, #tpu.memory_space<vmem>>, %arg8: memref<128x128xbf16, #tpu.memory_space<vmem>>) attributes {dimension_semantics = [#tpu.dimension_semantics<arbitrary>, #tpu.dimension_semantics<arbitrary>], iteration_bounds = array<i64: 4, 1>, scalar_prefetch = 0 : i64, scratch_operands = 2 : i64, tpu.core_type = #tpu.core_type<tc>, window_params = [{pipeline_mode = #tpu.pipeline_mode<synchronous>, transform_indices = @transform_0, window_bounds = array<i64: 128, 128>}, {pipeline_mode = #tpu.pipeline_mode<synchronous>, transform_indices = @transform_1, window_bounds = array<i64: 128, 128>}, {transform_indices = @transform_2, window_bounds = array<i64: 1, 128, 128>}, {transform_indices = @transform_3, window_bounds = array<i64: 1, 1, 128>}, {transform_indices = @transform_4, window_bounds = array<i64: 128, 128>}]} {
    %c128_i32 = arith.constant 128 : i32
    %0 = arith.muli %arg1, %c128_i32 : i32
    %1 = tpu.assume_multiple %0, 128 : i32
    %2 = arith.index_cast %1 : i32 to index
    %c0 = arith.constant 0 : index
    %3 = vector.load %arg2[%2, %c0] : memref<128x128xbf16, #tpu.memory_space<vmem>>, vector<128x128xbf16>
    %c0_i32 = arith.constant 0 : i32
    %4 = arith.cmpi eq, %arg0, %c0_i32 : i32
    %5 = arith.extui %4 : i1 to i32
    %c0_i32_0 = arith.constant 0 : i32
    %6 = arith.cmpi ne, %5, %c0_i32_0 : i32
    scf.if %6 {
      %c0_4 = arith.constant 0 : index
      %c0_5 = arith.constant 0 : index
      %16 = vector.load %arg3[%c0_4, %c0_5] : memref<128x128xbf16, #tpu.memory_space<vmem>>, vector<128x128xbf16>
      %cst = arith.constant dense<0.000000e+00> : vector<128x128xf32>
      %17 = tpu.matmul %3, %16, %cst {dimension_numbers = #tpu.dot_dimension_numbers<[1], [0], [0], [1], [0, 0, 1, 1], [], []>} : vector<128x128xbf16>, vector<128x128xbf16>, vector<128x128xf32> -> vector<128x128xf32>
      %c0_6 = arith.constant 0 : index
      %c0_7 = arith.constant 0 : index
      %c0_8 = arith.constant 0 : index
      %18 = vector.load %arg4[%c0_6, %c0_7, %c0_8] : memref<1x128x128xf32, #tpu.memory_space<vmem>>, vector<1x128x128xf32>
      %19 = vector.shape_cast %18 : vector<1x128x128xf32> to vector<128x128xf32>
      %cst_9 = arith.constant dense<0.000000e+00> : vector<128x128xf32>
      %20 = tpu.matmul %17, %19, %cst_9 {dimension_numbers = #tpu.dot_dimension_numbers<[1], [0], [0], [1], [0, 0, 1, 1], [], []>} : vector<128x128xf32>, vector<128x128xf32>, vector<128x128xf32> -> vector<128x128xf32>
      %c0_10 = arith.constant 0 : index
      %c0_11 = arith.constant 0 : index
      %c0_12 = arith.constant 0 : index
      %21 = vector.load %arg5[%c0_10, %c0_11, %c0_12] : memref<1x1x128xf32, #tpu.memory_space<vmem>>, vector<1x1x128xf32>
      %22 = vector.shape_cast %21 : vector<1x1x128xf32> to vector<1x128xf32>
      %23 = vector.broadcast %22 : vector<1x128xf32> to vector<128x128xf32>
      %24 = arith.addf %20, %23 : vector<128x128xf32>
      %cst_13 = arith.constant 0.000000e+00 : f32
      %25 = vector.broadcast %cst_13 : f32 to vector<128x128xf32>
      %26 = arith.maximumf %24, %25 : vector<128x128xf32>
      %27 = arith.truncf %26 : vector<128x128xf32> to vector<128x128xbf16>
      %28 = arith.index_cast %1 : i32 to index
      %c0_14 = arith.constant 0 : index
      %29 = vector.load %arg7[%28, %c0_14] : memref<128x128xbf16, #tpu.memory_space<vmem>>, vector<128x128xbf16>
      tpu.vector_store %arg7[%28, %c0_14], %27 {strides = array<i32>} : memref<128x128xbf16, #tpu.memory_space<vmem>>, vector<128x128xbf16>,
    } else {
    }
    %c1_i32 = arith.constant 1 : i32
    %7 = arith.cmpi eq, %arg0, %c1_i32 : i32
    %8 = arith.extui %7 : i1 to i32
    %c0_i32_1 = arith.constant 0 : i32
    %9 = arith.cmpi ne, %8, %c0_i32_1 : i32
    scf.if %9 {
      %c0_4 = arith.constant 0 : index
      %c0_5 = arith.constant 0 : index
      %16 = vector.load %arg7[%c0_4, %c0_5] : memref<128x128xbf16, #tpu.memory_space<vmem>>, vector<128x128xbf16>
      %cst = arith.constant dense<0.000000e+00> : vector<128x128xf32>
      %17 = tpu.matmul %3, %16, %cst {dimension_numbers = #tpu.dot_dimension_numbers<[1], [0], [0], [1], [0, 0, 1, 1], [], []>} : vector<128x128xbf16>, vector<128x128xbf16>, vector<128x128xf32> -> vector<128x128xf32>
      %c0_6 = arith.constant 0 : index
      %c0_7 = arith.constant 0 : index
      %c0_8 = arith.constant 0 : index
      %18 = vector.load %arg4[%c0_6, %c0_7, %c0_8] : memref<1x128x128xf32, #tpu.memory_space<vmem>>, vector<1x128x128xf32>
      %19 = vector.shape_cast %18 : vector<1x128x128xf32> to vector<128x128xf32>
      %cst_9 = arith.constant dense<0.000000e+00> : vector<128x128xf32>
      %20 = tpu.matmul %17, %19, %cst_9 {dimension_numbers = #tpu.dot_dimension_numbers<[1], [0], [0], [1], [0, 0, 1, 1], [], []>} : vector<128x128xf32>, vector<128x128xf32>, vector<128x128xf32> -> vector<128x128xf32>
      %c0_10 = arith.constant 0 : index
      %c0_11 = arith.constant 0 : index
      %c0_12 = arith.constant 0 : index
      %21 = vector.load %arg5[%c0_10, %c0_11, %c0_12] : memref<1x1x128xf32, #tpu.memory_space<vmem>>, vector<1x1x128xf32>
      %22 = vector.shape_cast %21 : vector<1x1x128xf32> to vector<1x128xf32>
      %23 = vector.broadcast %22 : vector<1x128xf32> to vector<128x128xf32>
      %24 = arith.addf %20, %23 : vector<128x128xf32>
      %cst_13 = arith.constant 0.000000e+00 : f32
      %25 = vector.broadcast %cst_13 : f32 to vector<128x128xf32>
      %26 = arith.maximumf %24, %25 : vector<128x128xf32>
      %27 = arith.truncf %26 : vector<128x128xf32> to vector<128x128xbf16>
      %28 = arith.index_cast %1 : i32 to index
      %c0_14 = arith.constant 0 : index
      %29 = vector.load %arg8[%28, %c0_14] : memref<128x128xbf16, #tpu.memory_space<vmem>>, vector<128x128xbf16>
      tpu.vector_store %arg8[%28, %c0_14], %27 {strides = array<i32>} : memref<128x128xbf16, #tpu.memory_space<vmem>>, vector<128x128xbf16>,
    } else {
    }
    %c2_i32 = arith.constant 2 : i32
    %10 = arith.cmpi eq, %arg0, %c2_i32 : i32
    %11 = arith.extui %10 : i1 to i32
    %c0_i32_2 = arith.constant 0 : i32
    %12 = arith.cmpi ne, %11, %c0_i32_2 : i32
    scf.if %12 {
      %c0_4 = arith.constant 0 : index
      %c0_5 = arith.constant 0 : index
      %16 = vector.load %arg8[%c0_4, %c0_5] : memref<128x128xbf16, #tpu.memory_space<vmem>>, vector<128x128xbf16>
      %cst = arith.constant dense<0.000000e+00> : vector<128x128xf32>
      %17 = tpu.matmul %3, %16, %cst {dimension_numbers = #tpu.dot_dimension_numbers<[1], [0], [0], [1], [0, 0, 1, 1], [], []>} : vector<128x128xbf16>, vector<128x128xbf16>, vector<128x128xf32> -> vector<128x128xf32>
      %c0_6 = arith.constant 0 : index
      %c0_7 = arith.constant 0 : index
      %c0_8 = arith.constant 0 : index
      %18 = vector.load %arg4[%c0_6, %c0_7, %c0_8] : memref<1x128x128xf32, #tpu.memory_space<vmem>>, vector<1x128x128xf32>
      %19 = vector.shape_cast %18 : vector<1x128x128xf32> to vector<128x128xf32>
      %cst_9 = arith.constant dense<0.000000e+00> : vector<128x128xf32>
      %20 = tpu.matmul %17, %19, %cst_9 {dimension_numbers = #tpu.dot_dimension_numbers<[1], [0], [0], [1], [0, 0, 1, 1], [], []>} : vector<128x128xf32>, vector<128x128xf32>, vector<128x128xf32> -> vector<128x128xf32>
      %c0_10 = arith.constant 0 : index
      %c0_11 = arith.constant 0 : index
      %c0_12 = arith.constant 0 : index
      %21 = vector.load %arg5[%c0_10, %c0_11, %c0_12] : memref<1x1x128xf32, #tpu.memory_space<vmem>>, vector<1x1x128xf32>
      %22 = vector.shape_cast %21 : vector<1x1x128xf32> to vector<1x128xf32>
      %23 = vector.broadcast %22 : vector<1x128xf32> to vector<128x128xf32>
      %24 = arith.addf %20, %23 : vector<128x128xf32>
      %cst_13 = arith.constant 0.000000e+00 : f32
      %25 = vector.broadcast %cst_13 : f32 to vector<128x128xf32>
      %26 = arith.maximumf %24, %25 : vector<128x128xf32>
      %27 = arith.truncf %26 : vector<128x128xf32> to vector<128x128xbf16>
      %28 = arith.index_cast %1 : i32 to index
      %c0_14 = arith.constant 0 : index
      %29 = vector.load %arg7[%28, %c0_14] : memref<128x128xbf16, #tpu.memory_space<vmem>>, vector<128x128xbf16>
      tpu.vector_store %arg7[%28, %c0_14], %27 {strides = array<i32>} : memref<128x128xbf16, #tpu.memory_space<vmem>>, vector<128x128xbf16>,
    } else {
    }
    %c3_i32 = arith.constant 3 : i32
    %13 = arith.cmpi eq, %arg0, %c3_i32 : i32
    %14 = arith.extui %13 : i1 to i32
    %c0_i32_3 = arith.constant 0 : i32
    %15 = arith.cmpi ne, %14, %c0_i32_3 : i32
    scf.if %15 {
      %c0_4 = arith.constant 0 : index
      %c0_5 = arith.constant 0 : index
      %16 = vector.load %arg7[%c0_4, %c0_5] : memref<128x128xbf16, #tpu.memory_space<vmem>>, vector<128x128xbf16>
      %cst = arith.constant dense<0.000000e+00> : vector<128x128xf32>
      %17 = tpu.matmul %3, %16, %cst {dimension_numbers = #tpu.dot_dimension_numbers<[1], [0], [0], [1], [0, 0, 1, 1], [], []>} : vector<128x128xbf16>, vector<128x128xbf16>, vector<128x128xf32> -> vector<128x128xf32>
      %c0_6 = arith.constant 0 : index
      %c0_7 = arith.constant 0 : index
      %c0_8 = arith.constant 0 : index
      %18 = vector.load %arg4[%c0_6, %c0_7, %c0_8] : memref<1x128x128xf32, #tpu.memory_space<vmem>>, vector<1x128x128xf32>
      %19 = vector.shape_cast %18 : vector<1x128x128xf32> to vector<128x128xf32>
      %cst_9 = arith.constant dense<0.000000e+00> : vector<128x128xf32>
      %20 = tpu.matmul %17, %19, %cst_9 {dimension_numbers = #tpu.dot_dimension_numbers<[1], [0], [0], [1], [0, 0, 1, 1], [], []>} : vector<128x128xf32>, vector<128x128xf32>, vector<128x128xf32> -> vector<128x128xf32>
      %c0_10 = arith.constant 0 : index
      %c0_11 = arith.constant 0 : index
      %c0_12 = arith.constant 0 : index
      %21 = vector.load %arg5[%c0_10, %c0_11, %c0_12] : memref<1x1x128xf32, #tpu.memory_space<vmem>>, vector<1x1x128xf32>
      %22 = vector.shape_cast %21 : vector<1x1x128xf32> to vector<1x128xf32>
      %23 = vector.broadcast %22 : vector<1x128xf32> to vector<128x128xf32>
      %24 = arith.addf %20, %23 : vector<128x128xf32>
      %25 = tpu.iota {dimensions = array<i32: 1>} : vector<128x128xi32>
      %c8_i32 = arith.constant 8 : i32
      %26 = vector.broadcast %c8_i32 : i32 to vector<128x128xi32>
      %27 = arith.cmpi slt, %25, %26 : vector<128x128xi32>
      %cst_13 = arith.constant -1.000000e+30 : f32
      %28 = vector.broadcast %cst_13 : f32 to vector<128x128xf32>
      %29 = arith.select %27, %24, %28 : vector<128x128xi1>, vector<128x128xf32>
      %cst_14 = arith.constant dense<0xFF800000> : vector<128xf32>
      %30 = vector.multi_reduction <maximumf>, %29, %cst_14 [1] : vector<128x128xf32> to vector<128xf32>
      %31 = vector.shape_cast %30 : vector<128xf32> to vector<128x1xf32>
      %32 = vector.broadcast %31 : vector<128x1xf32> to vector<128x128xf32>
      %33 = arith.subf %29, %32 : vector<128x128xf32>
      %34 = math.exp %33 : vector<128x128xf32>
      %cst_15 = arith.constant 0.000000e+00 : f32
      %35 = vector.broadcast %cst_15 : f32 to vector<128x128xf32>
      %36 = arith.select %27, %34, %35 : vector<128x128xi1>, vector<128x128xf32>
      %cst_16 = arith.constant dense<0.000000e+00> : vector<128xf32>
      %37 = vector.multi_reduction <add>, %36, %cst_16 [1] : vector<128x128xf32> to vector<128xf32>
      %38 = vector.shape_cast %37 : vector<128xf32> to vector<128x1xf32>
      %39 = math.log %38 : vector<128x1xf32>
      %40 = vector.broadcast %31 : vector<128x1xf32> to vector<128x128xf32>
      %41 = arith.subf %24, %40 : vector<128x128xf32>
      %42 = vector.broadcast %39 : vector<128x1xf32> to vector<128x128xf32>
      %43 = arith.subf %41, %42 : vector<128x128xf32>
      %c0_17 = arith.constant 0 : index
      %c0_18 = arith.constant 0 : index
      %44 = vector.load %arg6[%c0_17, %c0_18] : memref<128x128xf32, #tpu.memory_space<vmem>>, vector<128x128xf32>
      tpu.vector_store %arg6[%c0_17, %c0_18], %43 {strides = array<i32>} : memref<128x128xf32, #tpu.memory_space<vmem>>, vector<128x128xf32>,
    } else {
    }
    return
  }
  func.func @transform_0(%arg0: i32, %arg1: i32) -> (i32, i32) {
    %c0_i32 = arith.constant 0 : i32
    %c0_i32_0 = arith.constant 0 : i32
    %c0_i32_1 = arith.constant 0 : i32
    return %c0_i32, %c0_i32_0 : i32, i32
  }
  func.func @transform_1(%arg0: i32, %arg1: i32) -> (i32, i32) {
    %c0_i32 = arith.constant 0 : i32
    %c0_i32_0 = arith.constant 0 : i32
    %c0_i32_1 = arith.constant 0 : i32
    return %c0_i32, %c0_i32_0 : i32, i32
  }
  func.func @transform_2(%arg0: i32, %arg1: i32) -> (i32, i32, i32) {
    %c0_i32 = arith.constant 0 : i32
    %c0_i32_0 = arith.constant 0 : i32
    %c0_i32_1 = arith.constant 0 : i32
    return %arg0, %c0_i32, %c0_i32_0 : i32, i32, i32
  }
  func.func @transform_3(%arg0: i32, %arg1: i32) -> (i32, i32, i32) {
    %c0_i32 = arith.constant 0 : i32
    %c0_i32_0 = arith.constant 0 : i32
    %c0_i32_1 = arith.constant 0 : i32
    return %arg0, %c0_i32, %c0_i32_0 : i32, i32, i32
  }
  func.func @transform_4(%arg0: i32, %arg1: i32) -> (i32, i32) {
    %c0_i32 = arith.constant 0 : i32
    %c0_i32_0 = arith.constant 0 : i32
    return %arg1, %c0_i32 : i32, i32
  }
}

</mosaic_0001>

<llo_original>
// kernel: gcn_forward.1
$region0: #{gcn_forward.1}
  #allocation0 [shape = 'u32[]', space=smem, size = 0x4, offset = 0x4, fixed_abs, tag = 'smem constant byte address 0x4 - core index']
  #allocation1 [shape = 'u32[144,128]{1,0:T(1,128)}', space=vmem, size = 0x12000, scoped, tag = 'internal scratch']
  #allocation2 [shape = 'bf16[128,128]{1,0:T(8,128)(2,1)}', space=vmem, size = 0x8000, scoped, tag = 'scratch operand']
  #allocation3 [shape = 'bf16[128,128]{1,0:T(8,128)(2,1)}', space=vmem, size = 0x8000, scoped, tag = 'scratch operand']
  %s0 = inlined_call_operand.vmem [shape: bf16[128,128], index: 0, kind: input, shape index: {}]
  %s1 = inlined_call_operand.vmem [shape: bf16[128,128], index: 1, kind: input, shape index: {}]
  %s2 = inlined_call_operand.vmem [shape: f32[4,128,128], index: 2, kind: input, shape index: {}]
  %s3 = inlined_call_operand.vmem [shape: f32[4,1,128], index: 3, kind: input, shape index: {}]
  %s4 = inlined_call_operand.vmem [shape: f32[128,128], index: 4, kind: output, shape index: {}]
  %s5 = sld [smem:[#allocation0]]
  $region65: #{gcn_forward.1} parent=0
    _
  %s7 = ssub.s32 1, %s5
  %s8 = scalar_select 0, %s7, %s5
  loop: start=0, step=1, limit=6
  $region2: #{gcn_forward.1} parent=0 // loop_pre_header
    _
  $region3: #{gcn_forward.1} parent=0 // loop_header
    %s10 = sphi 0, %s14
    %p11 = scmp.ge.s32.totalorder %s10, 6
    %s17 = sphi 0, %s29
    %s18 = sphi 0, %s25
    %s19 = sphi 0, %s17
    %s20 = sphi 0, %s18
    %s21 = sphi 0, %s19
    %s22 = sphi 0, %s20
    %s30 = sphi 0, %s30
    %s32 = sphi 0, %s30
    %s33 = sphi 0, %s32
    %s47 = sphi 0, %s33
    %s51 = sphi 0, %s51
    %s53 = sphi 0, %s51
    %s54 = sphi 0, %s53
    %s68 = sphi 0, %s54
    %s74 = sphi 0, %s76
    %s77 = sphi 0, %s74
    %s78 = sphi 0, %s77
    %s94 = sphi 0, %s78
    %s100 = sphi 0, %s102
    %s103 = sphi 0, %s100
    %s104 = sphi 0, %s103
    %s120 = sphi 0, %s104
    %s126 = sphi 0, %s128
    %s129 = sphi 0, %s126
    %s130 = sphi 0, %s129
    %s146 = sphi 0, %s130
  $region4: #{gcn_forward.1} parent=0 // loop_header_branch
    %13 = sbr.rel (%p11) target = $region8
  $region5: #{gcn_forward.1} parent=0 // loop_body
    %s15 = ssub.s32 %s10, 1
    %s16 = ssub.s32 %s10, 2
    %s23 = sadd.s32 1, %s18
    %p24 = scmp.ge.s32.totalorder %s23, 1
    %s25 = scalar_select %p24, 0, %s23
    %s26 = sadd.s32 1, %s17
    %s27 = scalar_select %p24, %s26, %s17
    %p28 = scmp.ge.s32.totalorder %s27, 4
    %s29 = scalar_select %p28, 0, %s27
    %s31 = sadd.s32 %s30, 1
    %p34 = scmp.eq.s32.totalorder %s10, 3
    %p35 = scmp.ne.s32.totalorder %s30, %s32
    %p36 = scmp.eq.s32.totalorder %s10, 0
    %p37 = por %p35, %p36
    %p38 = scmp.ne.s32.totalorder %s30, %s32
    %p39 = scmp.eq.s32.totalorder %s15, 3
    %p40 = por %p38, %p39
    %p41 = scmp.ne.s32.totalorder %s32, %s33
    %p42 = scmp.eq.s32.totalorder %s15, 0
    %p43 = por %p41, %p42
    %p44 = scmp.ne.s32.totalorder %s32, %s33
    %p45 = scmp.eq.s32.totalorder %s16, 3
    %p46 = por %p44, %p45
    %p48 = scmp.ne.s32.totalorder %s33, %s47
    %p49 = scmp.eq.s32.totalorder %s16, 0
    %p50 = por %p48, %p49
    %s52 = sadd.s32 %s51, 1
    %p55 = scmp.eq.s32.totalorder %s10, 3
    %p56 = scmp.ne.s32.totalorder %s51, %s53
    %p57 = scmp.eq.s32.totalorder %s10, 0
    %p58 = por %p56, %p57
    %p59 = scmp.ne.s32.totalorder %s51, %s53
    %p60 = scmp.eq.s32.totalorder %s15, 3
    %p61 = por %p59, %p60
    %p62 = scmp.ne.s32.totalorder %s53, %s54
    %p63 = scmp.eq.s32.totalorder %s15, 0
    %p64 = por %p62, %p63
    %p65 = scmp.ne.s32.totalorder %s53, %s54
    %p66 = scmp.eq.s32.totalorder %s16, 3
    %p67 = por %p65, %p66
    %p69 = scmp.ne.s32.totalorder %s54, %s68
    %p70 = scmp.eq.s32.totalorder %s16, 0
    %p71 = por %p69, %p70
    %s72 = ssub.s32 %s17, %s29
    %p73 = scmp.eq.s32.totalorder %s72, 0
    %s75 = sadd.s32 %s74, 1
    %s76 = scalar_select %p73, %s74, %s75
    %p79 = pneg %p73
    %p80 = scmp.eq.s32.totalorder %s10, 3
    %p81 = por %p79, %p80
    %p82 = scmp.ne.s32.totalorder %s74, %s77
    %p83 = scmp.eq.s32.totalorder %s10, 0
    %p84 = por %p82, %p83
    %p85 = scmp.ne.s32.totalorder %s74, %s77
    %p86 = scmp.eq.s32.totalorder %s15, 3
    %p87 = por %p85, %p86
    %p88 = scmp.ne.s32.totalorder %s77, %s78
    %p89 = scmp.eq.s32.totalorder %s15, 0
    %p90 = por %p88, %p89
    %p91 = scmp.ne.s32.totalorder %s77, %s78
    %p92 = scmp.eq.s32.totalorder %s16, 3
    %p93 = por %p91, %p92
    %p95 = scmp.ne.s32.totalorder %s78, %s94
    %p96 = scmp.eq.s32.totalorder %s16, 0
    %p97 = por %p95, %p96
    %s98 = ssub.s32 %s17, %s29
    %p99 = scmp.eq.s32.totalorder %s98, 0
    %s101 = sadd.s32 %s100, 1
    %s102 = scalar_select %p99, %s100, %s101
    %p105 = pneg %p99
    %p106 = scmp.eq.s32.totalorder %s10, 3
    %p107 = por %p105, %p106
    %p108 = scmp.ne.s32.totalorder %s100, %s103
    %p109 = scmp.eq.s32.totalorder %s10, 0
    %p110 = por %p108, %p109
    %p111 = scmp.ne.s32.totalorder %s100, %s103
    %p112 = scmp.eq.s32.totalorder %s15, 3
    %p113 = por %p111, %p112
    %p114 = scmp.ne.s32.totalorder %s103, %s104
    %p115 = scmp.eq.s32.totalorder %s15, 0
    %p116 = por %p114, %p115
    %p117 = scmp.ne.s32.totalorder %s103, %s104
    %p118 = scmp.eq.s32.totalorder %s16, 3
    %p119 = por %p117, %p118
    %p121 = scmp.ne.s32.totalorder %s104, %s120
    %p122 = scmp.eq.s32.totalorder %s16, 0
    %p123 = por %p121, %p122
    %s124 = ssub.s32 %s18, %s25
    %p125 = scmp.eq.s32.totalorder %s124, 0
    %s127 = sadd.s32 %s126, 1
    %s128 = scalar_select %p125, %s126, %s127
    %p131 = pneg %p125
    %p132 = scmp.eq.s32.totalorder %s10, 3
    %p133 = por %p131, %p132
    %p134 = scmp.ne.s32.totalorder %s126, %s129
    %p135 = scmp.eq.s32.totalorder %s10, 0
    %p136 = por %p134, %p135
    %p137 = scmp.ne.s32.totalorder %s126, %s129
    %p138 = scmp.eq.s32.totalorder %s15, 3
    %p139 = por %p137, %p138
    %p140 = scmp.ne.s32.totalorder %s129, %s130
    %p141 = scmp.eq.s32.totalorder %s15, 0
    %p142 = por %p140, %p141
    %p143 = scmp.ne.s32.totalorder %s129, %s130
    %p144 = scmp.eq.s32.totalorder %s16, 3
    %p145 = por %p143, %p144
    %p147 = scmp.ne.s32.totalorder %s130, %s146
    %p148 = scmp.eq.s32.totalorder %s16, 0
    %p149 = por %p147, %p148
    %p150 = scmp.le.s32.totalorder 1, %s10
    %p151 = scmp.lt.s32.totalorder %s10, 5
    %p152 = pnand %p150, %p151
    %p153 = pneg %p152
    // Predicated region
    $region9: #{gcn_forward.1} parent=5 // pred_check
      _
    $region10: #{gcn_forward.1} parent=5 // pred_check_branch
      %155 = sbr.rel (%p152) target = $region12
    $region11: #{gcn_forward.1} parent=5 // pred_region
      %s156 = ssub.s32 %s10, 1
      // Predicated region
      $region13: #{gcn_forward.1} parent=11 // pred_check
        %p157 = pneg %p43
      $region14: #{gcn_forward.1} parent=11 // pred_check_branch
        %159 = sbr.rel (%p157) target = $region16
      $region15: #{gcn_forward.1} parent=11 // pred_region
        _
      $region16: #{gcn_forward.1} parent=11 // pred_fallthru
        _
      // Predicated region
      $region17: #{gcn_forward.1} parent=11 // pred_check
        %p160 = pneg %p64
      $region18: #{gcn_forward.1} parent=11 // pred_check_branch
        %162 = sbr.rel (%p160) target = $region20
      $region19: #{gcn_forward.1} parent=11 // pred_region
        _
      $region20: #{gcn_forward.1} parent=11 // pred_fallthru
        _
    $region12: #{gcn_forward.1} parent=5 // pred_fallthru
      _
    %p163 = scmp.lt.s32.totalorder %s10, 4
    // Predicated region
    $region21: #{gcn_forward.1} parent=5 // pred_check
      %p164 = pneg %p163
    $region22: #{gcn_forward.1} parent=5 // pred_check_branch
      %166 = sbr.rel (%p164) target = $region24
    $region23: #{gcn_forward.1} parent=5 // pred_region
      // Predicated region
      $region25: #{gcn_forward.1} parent=23 // pred_check
        %p167 = pneg %p84
      $region26: #{gcn_forward.1} parent=23 // pred_check_branch
        %169 = sbr.rel (%p167) target = $region28
      $region27: #{gcn_forward.1} parent=23 // pred_region
        %p170 = scmp.lt.s32.totalorder %s17, 3
        %s171 = scalar_select %p170, %s17, 3
        %s172 = smul.addr %s171, 16
        %s173 = smul.addr %s172, 8
        %s174 = scalar_lea.vmem %s2, %s173
      $region28: #{gcn_forward.1} parent=23 // pred_fallthru
        _
      // Predicated region
      $region29: #{gcn_forward.1} parent=23 // pred_check
        %p175 = pneg %p110
      $region30: #{gcn_forward.1} parent=23 // pred_check_branch
        %177 = sbr.rel (%p175) target = $region32
      $region31: #{gcn_forward.1} parent=23 // pred_region
        %p178 = scmp.lt.s32.totalorder %s17, 3
        %s179 = scalar_select %p178, %s17, 3
        %s180 = scalar_lea.vmem %s3, %s179
      $region32: #{gcn_forward.1} parent=23 // pred_fallthru
        _
    $region24: #{gcn_forward.1} parent=5 // pred_fallthru
      _
    %p181 = scmp.le.s32.totalorder 1, %s10
    %p182 = scmp.lt.s32.totalorder %s10, 5
    %p183 = pnand %p181, %p182
    %p184 = pneg %p183
    // Predicated region
    $region33: #{gcn_forward.1} parent=5 // pred_check
      _
    $region34: #{gcn_forward.1} parent=5 // pred_check_branch
      %186 = sbr.rel (%p183) target = $region36
    $region35: #{gcn_forward.1} parent=5 // pred_region
      %s187 = ssub.s32 %s10, 1
      %p188 = pneg %p43
      %p189 = pneg %p40
      %p190 = pneg %p64
      %p191 = pneg %p61
      %p192 = scmp.lt.s32.totalorder %s19, 3
      %s193 = scalar_select %p192, %s19, 3
      %s194 = smul.addr %s193, 16
      %s195 = smul.addr %s194, 8
      %s196 = scalar_lea.vmem %s2, %s195
      %p197 = pneg %p90
      %p198 = pneg %p87
      %p199 = scmp.lt.s32.totalorder %s19, 3
      %s200 = scalar_select %p199, %s19, 3
      %s201 = scalar_lea.vmem %s3, %s200
      %p202 = pneg %p116
      %p203 = pneg %p113
      %p204 = pneg %p142
      %p205 = pneg %p139
      %s206 = smul.u32 16, %s20
      %p207 = scmp.lt.s32.totalorder %s206, 15
      %s208 = scalar_select %p207, %s206, 15
      %s209 = smul.addr %s208, 8
      %s210 = scalar_lea.vmem %s4, %s209
      %p211 = scmp.lt.s32.totalorder %s19, 3
      %s212 = scalar_select %p211, %s19, 3
      %s213 = smul.addr %s212, 16
      %s214 = smul.addr %s213, 8
      %s215 = scalar_lea.vmem %s2, %s214
      %p216 = scmp.lt.s32.totalorder %s19, 3
      %s217 = scalar_select %p216, %s19, 3
      %s218 = scalar_lea.vmem %s3, %s217
      %s219 = smul.u32 16, %s20
      %p220 = scmp.lt.s32.totalorder %s219, 15
      %s221 = scalar_select %p220, %s219, 15
      %s222 = smul.addr %s221, 8
      %s223 = scalar_lea.vmem %s4, %s222
      %s224 = smul.u32 16, %s20
      %s226 = smul.u32 %s20, 128
      %s227 = sshra.s32 %s226, 3
      %s228 = sand.u32 %s226, 7
      %s229 = smul.addr %s227, 4
      %s230 = scalar_lea.vmem %s0, %s229
      %v231 = vld [vmem:[%s230] sm:$0xf]
      %v232 = vld [vmem:[%s230 + $0x4] sm:$0xf]
      %v233 = vld [vmem:[%s230 + $0x8] sm:$0xf]
      %v234 = vld [vmem:[%s230 + $0xc] sm:$0xf]
      %v235 = vld [vmem:[%s230 + $0x10] sm:$0xf]
      %v236 = vld [vmem:[%s230 + $0x14] sm:$0xf]
      %v237 = vld [vmem:[%s230 + $0x18] sm:$0xf]
      %v238 = vld [vmem:[%s230 + $0x1c] sm:$0xf]
      %v239 = vld [vmem:[%s230 + $0x20] sm:$0xf]
      %v240 = vld [vmem:[%s230 + $0x24] sm:$0xf]
      %v241 = vld [vmem:[%s230 + $0x28] sm:$0xf]
      %v242 = vld [vmem:[%s230 + $0x2c] sm:$0xf]
      %v243 = vld [vmem:[%s230 + $0x30] sm:$0xf]
      %v244 = vld [vmem:[%s230 + $0x34] sm:$0xf]
      %v245 = vld [vmem:[%s230 + $0x38] sm:$0xf]
      %v246 = vld [vmem:[%s230 + $0x3c] sm:$0xf]
      %p247 = scmp.eq.s32.totalorder %s19, 0
      // Predicated region
      $region37: #{gcn_forward.1} parent=35 // pred_check
        %p248 = pneg %p247
      $region38: #{gcn_forward.1} parent=35 // pred_check_branch
        %250 = sbr.rel (%p248) target = $region40
      $region39: #{gcn_forward.1} parent=35 // pred_region
        %v251 = vld [vmem:[%s1] sm:$0xf]
        %v252 = vld [vmem:[%s1 + $0x4] sm:$0xf]
        %v253 = vld [vmem:[%s1 + $0x8] sm:$0xf]
        %v254 = vld [vmem:[%s1 + $0xc] sm:$0xf]
        %v255 = vld [vmem:[%s1 + $0x10] sm:$0xf]
        %v256 = vld [vmem:[%s1 + $0x14] sm:$0xf]
        %v257 = vld [vmem:[%s1 + $0x18] sm:$0xf]
        %v258 = vld [vmem:[%s1 + $0x1c] sm:$0xf]
        %v259 = vld [vmem:[%s1 + $0x20] sm:$0xf]
        %v260 = vld [vmem:[%s1 + $0x24] sm:$0xf]
        %v261 = vld [vmem:[%s1 + $0x28] sm:$0xf]
        %v262 = vld [vmem:[%s1 + $0x2c] sm:$0xf]
        %v263 = vld [vmem:[%s1 + $0x30] sm:$0xf]
        %v264 = vld [vmem:[%s1 + $0x34] sm:$0xf]
        %v265 = vld [vmem:[%s1 + $0x38] sm:$0xf]
        %v266 = vld [vmem:[%s1 + $0x3c] sm:$0xf]
        %v283 = vunpack.c.l.b16 %v231
        %v284 = vunpack.c.l.b16 %v232
        %v285 = vunpack.c.l.b16 %v233
        %v286 = vunpack.c.l.b16 %v234
        %v287 = vunpack.c.l.b16 %v235
        %v288 = vunpack.c.l.b16 %v236
        %v289 = vunpack.c.l.b16 %v237
        %v290 = vunpack.c.l.b16 %v238
        %v291 = vunpack.c.l.b16 %v239
        %v292 = vunpack.c.l.b16 %v240
        %v293 = vunpack.c.l.b16 %v241
        %v294 = vunpack.c.l.b16 %v242
        %v295 = vunpack.c.l.b16 %v243
        %v296 = vunpack.c.l.b16 %v244
        %v297 = vunpack.c.l.b16 %v245
        %v298 = vunpack.c.l.b16 %v246
        %v299 = vpack.c.b16 %v284, %v283
        %v300 = vpack.c.b16 %v286, %v285
        %v301 = vpack.c.b16 %v288, %v287
        %v302 = vpack.c.b16 %v290, %v289
        %v303 = vpack.c.b16 %v292, %v291
        %v304 = vpack.c.b16 %v294, %v293
        %v305 = vpack.c.b16 %v296, %v295
        %v306 = vpack.c.b16 %v298, %v297
        %v331 = vunpack.c.l.b16 %v251
        %v332 = vunpack.c.l.b16 %v252
        %v333 = vunpack.c.l.b16 %v253
        %v334 = vunpack.c.l.b16 %v254
        %v335 = vunpack.c.l.b16 %v255
        %v336 = vunpack.c.l.b16 %v256
        %v337 = vunpack.c.l.b16 %v257
        %v338 = vunpack.c.l.b16 %v258
        %v339 = vunpack.c.l.b16 %v259
        %v340 = vunpack.c.l.b16 %v260
        %v341 = vunpack.c.l.b16 %v261
        %v342 = vunpack.c.l.b16 %v262
        %v343 = vunpack.c.l.b16 %v263
        %v344 = vunpack.c.l.b16 %v264
        %v345 = vunpack.c.l.b16 %v265
        %v346 = vunpack.c.l.b16 %v266
        %v347 = vpack.c.b16 %v332, %v331
        %v348 = vpack.c.b16 %v334, %v333
        %v349 = vpack.c.b16 %v336, %v335
        %v350 = vpack.c.b16 %v338, %v337
        %v351 = vpack.c.b16 %v340, %v339
        %v352 = vpack.c.b16 %v342, %v341
        %v353 = vpack.c.b16 %v344, %v343
        %v354 = vpack.c.b16 %v346, %v345
        %363 = vmatprep.subr.bf16.mxu0 0
        %364 = vmatpush1.bf16.msra.mxu0 %v354
        %365 = vmatprep.subr.bf16.mxu0 0
        %366 = vmatpush1.bf16.msra.mxu0 %v353
        %367 = vmatprep.subr.bf16.mxu0 0
        %368 = vmatpush1.bf16.msra.mxu0 %v352
        %369 = vmatprep.subr.bf16.mxu0 0
        %370 = vmatpush1.bf16.msra.mxu0 %v351
        %371 = vmatprep.subr.bf16.mxu0 0
        %372 = vmatpush1.bf16.msra.mxu0 %v350
        %373 = vmatprep.subr.bf16.mxu0 0
        %374 = vmatpush1.bf16.msra.mxu0 %v349
        %375 = vmatprep.subr.bf16.mxu0 0
        %376 = vmatpush1.bf16.msra.mxu0 %v348
        %377 = vmatprep.subr.bf16.mxu0 0
        %378 = vmatpush1.bf16.msra.mxu0 %v347
        %379 = vmatprep.subr.bf16.mxu0 0
        %380 = vmatpush2.bf16.msra.mxu0 0
        %381 = vmatprep.subr.bf16.mxu0 0
        %382 = vmatpush2.bf16.msra.mxu0 0
        %383 = vmatprep.subr.bf16.mxu0 0
        %384 = vmatpush2.bf16.msra.mxu0 0
        %385 = vmatprep.subr.bf16.mxu0 0
        %386 = vmatpush2.bf16.msra.mxu0 0
        %387 = vmatprep.subr.bf16.mxu0 0
        %388 = vmatpush2.bf16.msra.mxu0 0
        %389 = vmatprep.subr.bf16.mxu0 0
        %390 = vmatpush2.bf16.msra.mxu0 0
        %391 = vmatprep.subr.bf16.mxu0 0
        %392 = vmatpush2.bf16.msra.mxu0 0
        %393 = vmatprep.subr.bf16.mxu0 0
        %394 = vmatpush2.bf16.msra.mxu0 0
        %395 = vmatprep.mubr.bf16.mxu0 0
        %396 = vmatmul.mubr.bf16.gmra.mxu0 %v299
        %v397 = vpop.f32.mrf.mxu0
        %v398 = vadd.f32 0.0, %v397
        %v399 = vpop.f32.mrf.mxu0
        %v400 = vpop.f32.mrf.mxu0
        %v401 = vadd.f32 0.0, %v400
        %v402 = vpop.f32.mrf.mxu0
        %403 = vmatprep.mubr.bf16.mxu0 0
        %404 = vmatmul.mubr.bf16.gmra.mxu0 %v300
        %v405 = vpop.f32.mrf.mxu0
        %v406 = vadd.f32 0.0, %v405
        %v407 = vpop.f32.mrf.mxu0
        %v408 = vpop.f32.mrf.mxu0
        %v409 = vadd.f32 0.0, %v408
        %v410 = vpop.f32.mrf.mxu0
        %411 = vmatprep.mubr.bf16.mxu0 0
        %412 = vmatmul.mubr.bf16.gmra.mxu0 %v301
        %v413 = vpop.f32.mrf.mxu0
        %v414 = vadd.f32 0.0, %v413
        %v415 = vpop.f32.mrf.mxu0
        %v416 = vpop.f32.mrf.mxu0
        %v417 = vadd.f32 0.0, %v416
        %v418 = vpop.f32.mrf.mxu0
        %419 = vmatprep.mubr.bf16.mxu0 0
        %420 = vmatmul.mubr.bf16.gmra.mxu0 %v302
        %v421 = vpop.f32.mrf.mxu0
        %v422 = vadd.f32 0.0, %v421
        %v423 = vpop.f32.mrf.mxu0
        %v424 = vpop.f32.mrf.mxu0
        %v425 = vadd.f32 0.0, %v424
        %v426 = vpop.f32.mrf.mxu0
        %427 = vmatprep.mubr.bf16.mxu0 0
        %428 = vmatmul.mubr.bf16.gmra.mxu0 %v303
        %v429 = vpop.f32.mrf.mxu0
        %v430 = vadd.f32 0.0, %v429
        %v431 = vpop.f32.mrf.mxu0
        %v432 = vpop.f32.mrf.mxu0
        %v433 = vadd.f32 0.0, %v432
        %v434 = vpop.f32.mrf.mxu0
        %435 = vmatprep.mubr.bf16.mxu0 0
        %436 = vmatmul.mubr.bf16.gmra.mxu0 %v304
        %v437 = vpop.f32.mrf.mxu0
        %v438 = vadd.f32 0.0, %v437
        %v439 = vpop.f32.mrf.mxu0
        %v440 = vpop.f32.mrf.mxu0
        %v441 = vadd.f32 0.0, %v440
        %v442 = vpop.f32.mrf.mxu0
        %443 = vmatprep.mubr.bf16.mxu0 0
        %444 = vmatmul.mubr.bf16.gmra.mxu0 %v305
        %v445 = vpop.f32.mrf.mxu0
        %v446 = vadd.f32 0.0, %v445
        %v447 = vpop.f32.mrf.mxu0
        %v448 = vpop.f32.mrf.mxu0
        %v449 = vadd.f32 0.0, %v448
        %v450 = vpop.f32.mrf.mxu0
        %451 = vmatprep.mubr.bf16.mxu0 0
        %452 = vmatmul.mubr.bf16.gmra.mxu0 %v306
        %v453 = vpop.f32.mrf.mxu0
        %v454 = vadd.f32 0.0, %v453
        %v455 = vpop.f32.mrf.mxu0
        %v456 = vpop.f32.mrf.mxu0
        %v457 = vadd.f32 0.0, %v456
        %v458 = vpop.f32.mrf.mxu0
        %459 = vdwg.mxu0
        %v460 = vld [vmem:[%s215] sm:$0xff]
        %v461 = vld [vmem:[%s215 + $0x8] sm:$0xff]
        %v462 = vld [vmem:[%s215 + $0x10] sm:$0xff]
        %v463 = vld [vmem:[%s215 + $0x18] sm:$0xff]
        %v464 = vld [vmem:[%s215 + $0x20] sm:$0xff]
        %v465 = vld [vmem:[%s215 + $0x28] sm:$0xff]
        %v466 = vld [vmem:[%s215 + $0x30] sm:$0xff]
        %v467 = vld [vmem:[%s215 + $0x38] sm:$0xff]
        %v468 = vld [vmem:[%s215 + $0x40] sm:$0xff]
        %v469 = vld [vmem:[%s215 + $0x48] sm:$0xff]
        %v470 = vld [vmem:[%s215 + $0x50] sm:$0xff]
        %v471 = vld [vmem:[%s215 + $0x58] sm:$0xff]
        %v472 = vld [vmem:[%s215 + $0x60] sm:$0xff]
        %v473 = vld [vmem:[%s215 + $0x68] sm:$0xff]
        %v474 = vld [vmem:[%s215 + $0x70] sm:$0xff]
        %v475 = vld [vmem:[%s215 + $0x78] sm:$0xff]
        %v476 = vld [vmem:[%s218] sm:$0x1]
        %v478 = vlaneseq
        %v479 = vshrl.u32 %v478, 7
        %v480 = vsub.s32 0, %v479
        %v481 = vrot.slane %v476, %v480
        %483 = vmatprep.subr.mxu0 0.0
        %484 = vmatpush1.msra.mxu0 %v475
        %485 = vmatprep.subr.mxu0 0.0
        %486 = vmatpush1.msra.mxu0 %v474
        %487 = vmatprep.subr.mxu0 0.0
        %488 = vmatpush1.msra.mxu0 %v473
        %489 = vmatprep.subr.mxu0 0.0
        %490 = vmatpush1.msra.mxu0 %v472
        %491 = vmatprep.subr.mxu0 0.0
        %492 = vmatpush1.msra.mxu0 %v471
        %493 = vmatprep.subr.mxu0 0.0
        %494 = vmatpush1.msra.mxu0 %v470
        %495 = vmatprep.subr.mxu0 0.0
        %496 = vmatpush1.msra.mxu0 %v469
        %497 = vmatprep.subr.mxu0 0.0
        %498 = vmatpush1.msra.mxu0 %v468
        %499 = vmatprep.subr.mxu0 0.0
        %500 = vmatpush1.msra.mxu0 %v467
        %501 = vmatprep.subr.mxu0 0.0
        %502 = vmatpush1.msra.mxu0 %v466
        %503 = vmatprep.subr.mxu0 0.0
        %504 = vmatpush1.msra.mxu0 %v465
        %505 = vmatprep.subr.mxu0 0.0
        %506 = vmatpush1.msra.mxu0 %v464
        %507 = vmatprep.subr.mxu0 0.0
        %508 = vmatpush1.msra.mxu0 %v463
        %509 = vmatprep.subr.mxu0 0.0
        %510 = vmatpush1.msra.mxu0 %v462
        %511 = vmatprep.subr.mxu0 0.0
        %512 = vmatpush1.msra.mxu0 %v461
        %513 = vmatprep.subr.mxu0 0.0
        %514 = vmatpush1.msra.mxu0 %v460
        %515 = vmatprep.subr.mxu0 0.0
        %516 = vmatpush2.msra.mxu0 0.0
        %517 = vmatprep.subr.mxu0 0.0
        %518 = vmatpush2.msra.mxu0 0.0
        %519 = vmatprep.subr.mxu0 0.0
        %520 = vmatpush2.msra.mxu0 0.0
        %521 = vmatprep.subr.mxu0 0.0
        %522 = vmatpush2.msra.mxu0 0.0
        %523 = vmatprep.subr.mxu0 0.0
        %524 = vmatpush2.msra.mxu0 0.0
        %525 = vmatprep.subr.mxu0 0.0
        %526 = vmatpush2.msra.mxu0 0.0
        %527 = vmatprep.subr.mxu0 0.0
        %528 = vmatpush2.msra.mxu0 0.0
        %529 = vmatprep.subr.mxu0 0.0
        %530 = vmatpush2.msra.mxu0 0.0
        %531 = vmatprep.subr.mxu0 0.0
        %532 = vmatpush2.msra.mxu0 0.0
        %533 = vmatprep.subr.mxu0 0.0
        %534 = vmatpush2.msra.mxu0 0.0
        %535 = vmatprep.subr.mxu0 0.0
        %536 = vmatpush2.msra.mxu0 0.0
        %537 = vmatprep.subr.mxu0 0.0
        %538 = vmatpush2.msra.mxu0 0.0
        %539 = vmatprep.subr.mxu0 0.0
        %540 = vmatpush2.msra.mxu0 0.0
        %541 = vmatprep.subr.mxu0 0.0
        %542 = vmatpush2.msra.mxu0 0.0
        %543 = vmatprep.subr.mxu0 0.0
        %544 = vmatpush2.msra.mxu0 0.0
        %545 = vmatprep.subr.mxu0 0.0
        %546 = vmatpush2.msra.mxu0 0.0
        %547 = vmatprep.mubr.f32.mxu0 0.0
        %548 = vmatmul.mubr.f32.gmra.mxu0 %v398
        %v549 = vpop.f32.mrf.mxu0
        %v550 = vadd.f32 %v481, %v549
        %v551 = vpop.f32.mrf.mxu0
        %552 = vmatprep.mubr.f32.mxu0 0.0
        %553 = vmatmul.mubr.f32.gmra.mxu0 %v401
        %v554 = vpop.f32.mrf.mxu0
        %v555 = vadd.f32 %v481, %v554
        %v556 = vpop.f32.mrf.mxu0
        %557 = vmatprep.mubr.f32.mxu0 0.0
        %558 = vmatmul.mubr.f32.gmra.mxu0 %v406
        %v559 = vpop.f32.mrf.mxu0
        %v560 = vadd.f32 %v481, %v559
        %v561 = vpop.f32.mrf.mxu0
        %562 = vmatprep.mubr.f32.mxu0 0.0
        %563 = vmatmul.mubr.f32.gmra.mxu0 %v409
        %v564 = vpop.f32.mrf.mxu0
        %v565 = vadd.f32 %v481, %v564
        %v566 = vpop.f32.mrf.mxu0
        %567 = vmatprep.mubr.f32.mxu0 0.0
        %568 = vmatmul.mubr.f32.gmra.mxu0 %v414
        %v569 = vpop.f32.mrf.mxu0
        %v570 = vadd.f32 %v481, %v569
        %v571 = vpop.f32.mrf.mxu0
        %572 = vmatprep.mubr.f32.mxu0 0.0
        %573 = vmatmul.mubr.f32.gmra.mxu0 %v417
        %v574 = vpop.f32.mrf.mxu0
        %v575 = vadd.f32 %v481, %v574
        %v576 = vpop.f32.mrf.mxu0
        %577 = vmatprep.mubr.f32.mxu0 0.0
        %578 = vmatmul.mubr.f32.gmra.mxu0 %v422
        %v579 = vpop.f32.mrf.mxu0
        %v580 = vadd.f32 %v481, %v579
        %v581 = vpop.f32.mrf.mxu0
        %582 = vmatprep.mubr.f32.mxu0 0.0
        %583 = vmatmul.mubr.f32.gmra.mxu0 %v425
        %v584 = vpop.f32.mrf.mxu0
        %v585 = vadd.f32 %v481, %v584
        %v586 = vpop.f32.mrf.mxu0
        %587 = vmatprep.mubr.f32.mxu0 0.0
        %588 = vmatmul.mubr.f32.gmra.mxu0 %v430
        %v589 = vpop.f32.mrf.mxu0
        %v590 = vadd.f32 %v481, %v589
        %v591 = vpop.f32.mrf.mxu0
        %592 = vmatprep.mubr.f32.mxu0 0.0
        %593 = vmatmul.mubr.f32.gmra.mxu0 %v433
        %v594 = vpop.f32.mrf.mxu0
        %v595 = vadd.f32 %v481, %v594
        %v596 = vpop.f32.mrf.mxu0
        %597 = vmatprep.mubr.f32.mxu0 0.0
        %598 = vmatmul.mubr.f32.gmra.mxu0 %v438
        %v599 = vpop.f32.mrf.mxu0
        %v600 = vadd.f32 %v481, %v599
        %v601 = vpop.f32.mrf.mxu0
        %602 = vmatprep.mubr.f32.mxu0 0.0
        %603 = vmatmul.mubr.f32.gmra.mxu0 %v441
        %v604 = vpop.f32.mrf.mxu0
        %v605 = vadd.f32 %v481, %v604
        %v606 = vpop.f32.mrf.mxu0
        %607 = vmatprep.mubr.f32.mxu0 0.0
        %608 = vmatmul.mubr.f32.gmra.mxu0 %v446
        %v609 = vpop.f32.mrf.mxu0
        %v610 = vadd.f32 %v481, %v609
        %v611 = vpop.f32.mrf.mxu0
        %612 = vmatprep.mubr.f32.mxu0 0.0
        %613 = vmatmul.mubr.f32.gmra.mxu0 %v449
        %v614 = vpop.f32.mrf.mxu0
        %v615 = vadd.f32 %v481, %v614
        %v616 = vpop.f32.mrf.mxu0
        %617 = vmatprep.mubr.f32.mxu0 0.0
        %618 = vmatmul.mubr.f32.gmra.mxu0 %v454
        %v619 = vpop.f32.mrf.mxu0
        %v620 = vadd.f32 %v481, %v619
        %v621 = vpop.f32.mrf.mxu0
        %622 = vmatprep.mubr.f32.mxu0 0.0
        %623 = vmatmul.mubr.f32.gmra.mxu0 %v457
        %v624 = vpop.f32.mrf.mxu0
        %v625 = vadd.f32 %v481, %v624
        %v626 = vpop.f32.mrf.mxu0
        %627 = vdwg.mxu0
        %v628 = vmax.f32 %v550, 0.0
        %v629 = vmax.f32 %v555, 0.0
        %v630 = vmax.f32 %v560, 0.0
        %v631 = vmax.f32 %v565, 0.0
        %v632 = vmax.f32 %v570, 0.0
        %v633 = vmax.f32 %v575, 0.0
        %v634 = vmax.f32 %v580, 0.0
        %v635 = vmax.f32 %v585, 0.0
        %v636 = vmax.f32 %v590, 0.0
        %v637 = vmax.f32 %v595, 0.0
        %v638 = vmax.f32 %v600, 0.0
        %v639 = vmax.f32 %v605, 0.0
        %v640 = vmax.f32 %v610, 0.0
        %v641 = vmax.f32 %v615, 0.0
        %v642 = vmax.f32 %v620, 0.0
        %v643 = vmax.f32 %v625, 0.0
        %v644 = vpack.c.bf16 %v629, %v628
        %v645 = vpack.c.bf16 %v631, %v630
        %v646 = vpack.c.bf16 %v633, %v632
        %v647 = vpack.c.bf16 %v635, %v634
        %v648 = vpack.c.bf16 %v637, %v636
        %v649 = vpack.c.bf16 %v639, %v638
        %v650 = vpack.c.bf16 %v641, %v640
        %v651 = vpack.c.bf16 %v643, %v642
        %v660 = vunpack.c.l.b16 %v644
        %v661 = vunpack.c.h.b16 %v644
        %v662 = vunpack.c.l.b16 %v645
        %v663 = vunpack.c.h.b16 %v645
        %v664 = vunpack.c.l.b16 %v646
        %v665 = vunpack.c.h.b16 %v646
        %v666 = vunpack.c.l.b16 %v647
        %v667 = vunpack.c.h.b16 %v647
        %v668 = vunpack.c.l.b16 %v648
        %v669 = vunpack.c.h.b16 %v648
        %v670 = vunpack.c.l.b16 %v649
        %v671 = vunpack.c.h.b16 %v649
        %v672 = vunpack.c.l.b16 %v650
        %v673 = vunpack.c.h.b16 %v650
        %v674 = vunpack.c.l.b16 %v651
        %v675 = vunpack.c.h.b16 %v651
        %v676 = vpack.c.b16 %v660, %v660
        %v677 = vpack.c.b16 %v661, %v661
        %v678 = vpack.c.b16 %v662, %v662
        %v679 = vpack.c.b16 %v663, %v663
        %v680 = vpack.c.b16 %v664, %v664
        %v681 = vpack.c.b16 %v665, %v665
        %v682 = vpack.c.b16 %v666, %v666
        %v683 = vpack.c.b16 %v667, %v667
        %v684 = vpack.c.b16 %v668, %v668
        %v685 = vpack.c.b16 %v669, %v669
        %v686 = vpack.c.b16 %v670, %v670
        %v687 = vpack.c.b16 %v671, %v671
        %v688 = vpack.c.b16 %v672, %v672
        %v689 = vpack.c.b16 %v673, %v673
        %v690 = vpack.c.b16 %v674, %v674
        %v691 = vpack.c.b16 %v675, %v675
        %s708 = smul.addr %s227, 4
        %s709 = scalar_lea.vmem [#allocation2], %s708
        %710 = vst [vmem:[%s709] sm:$0xf] %v676
        %711 = vst [vmem:[%s709 + $0x4] sm:$0xf] %v677
        %712 = vst [vmem:[%s709 + $0x8] sm:$0xf] %v678
        %713 = vst [vmem:[%s709 + $0xc] sm:$0xf] %v679
        %714 = vst [vmem:[%s709 + $0x10] sm:$0xf] %v680
        %715 = vst [vmem:[%s709 + $0x14] sm:$0xf] %v681
        %716 = vst [vmem:[%s709 + $0x18] sm:$0xf] %v682
        %717 = vst [vmem:[%s709 + $0x1c] sm:$0xf] %v683
        %718 = vst [vmem:[%s709 + $0x20] sm:$0xf] %v684
        %719 = vst [vmem:[%s709 + $0x24] sm:$0xf] %v685
        %720 = vst [vmem:[%s709 + $0x28] sm:$0xf] %v686
        %721 = vst [vmem:[%s709 + $0x2c] sm:$0xf] %v687
        %722 = vst [vmem:[%s709 + $0x30] sm:$0xf] %v688
        %723 = vst [vmem:[%s709 + $0x34] sm:$0xf] %v689
        %724 = vst [vmem:[%s709 + $0x38] sm:$0xf] %v690
        %725 = vst [vmem:[%s709 + $0x3c] sm:$0xf] %v691
      $region40: #{gcn_forward.1} parent=35 // pred_fallthru
        _
      %p726 = scmp.eq.s32.totalorder %s19, 1
      // Predicated region
      $region41: #{gcn_forward.1} parent=35 // pred_check
        %p727 = pneg %p726
      $region42: #{gcn_forward.1} parent=35 // pred_check_branch
        %729 = sbr.rel (%p727) target = $region44
      $region43: #{gcn_forward.1} parent=35 // pred_region
        %v730 = vld [vmem:[#allocation2] sm:$0xf]
        %v731 = vld [vmem:[#allocation2 + $0x4] sm:$0xf]
        %v732 = vld [vmem:[#allocation2 + $0x8] sm:$0xf]
        %v733 = vld [vmem:[#allocation2 + $0xc] sm:$0xf]
        %v734 = vld [vmem:[#allocation2 + $0x10] sm:$0xf]
        %v735 = vld [vmem:[#allocation2 + $0x14] sm:$0xf]
        %v736 = vld [vmem:[#allocation2 + $0x18] sm:$0xf]
        %v737 = vld [vmem:[#allocation2 + $0x1c] sm:$0xf]
        %v738 = vld [vmem:[#allocation2 + $0x20] sm:$0xf]
        %v739 = vld [vmem:[#allocation2 + $0x24] sm:$0xf]
        %v740 = vld [vmem:[#allocation2 + $0x28] sm:$0xf]
        %v741 = vld [vmem:[#allocation2 + $0x2c] sm:$0xf]
        %v742 = vld [vmem:[#allocation2 + $0x30] sm:$0xf]
        %v743 = vld [vmem:[#allocation2 + $0x34] sm:$0xf]
        %v744 = vld [vmem:[#allocation2 + $0x38] sm:$0xf]
        %v745 = vld [vmem:[#allocation2 + $0x3c] sm:$0xf]
        %v762 = vunpack.c.l.b16 %v231
        %v763 = vunpack.c.l.b16 %v232
        %v764 = vunpack.c.l.b16 %v233
        %v765 = vunpack.c.l.b16 %v234
        %v766 = vunpack.c.l.b16 %v235
        %v767 = vunpack.c.l.b16 %v236
        %v768 = vunpack.c.l.b16 %v237
        %v769 = vunpack.c.l.b16 %v238
        %v770 = vunpack.c.l.b16 %v239
        %v771 = vunpack.c.l.b16 %v240
        %v772 = vunpack.c.l.b16 %v241
        %v773 = vunpack.c.l.b16 %v242
        %v774 = vunpack.c.l.b16 %v243
        %v775 = vunpack.c.l.b16 %v244
        %v776 = vunpack.c.l.b16 %v245
        %v777 = vunpack.c.l.b16 %v246
        %v778 = vpack.c.b16 %v763, %v762
        %v779 = vpack.c.b16 %v765, %v764
        %v780 = vpack.c.b16 %v767, %v766
        %v781 = vpack.c.b16 %v769, %v768
        %v782 = vpack.c.b16 %v771, %v770
        %v783 = vpack.c.b16 %v773, %v772
        %v784 = vpack.c.b16 %v775, %v774
        %v785 = vpack.c.b16 %v777, %v776
        %v810 = vunpack.c.l.b16 %v730
        %v811 = vunpack.c.l.b16 %v731
        %v812 = vunpack.c.l.b16 %v732
        %v813 = vunpack.c.l.b16 %v733
        %v814 = vunpack.c.l.b16 %v734
        %v815 = vunpack.c.l.b16 %v735
        %v816 = vunpack.c.l.b16 %v736
        %v817 = vunpack.c.l.b16 %v737
        %v818 = vunpack.c.l.b16 %v738
        %v819 = vunpack.c.l.b16 %v739
        %v820 = vunpack.c.l.b16 %v740
        %v821 = vunpack.c.l.b16 %v741
        %v822 = vunpack.c.l.b16 %v742
        %v823 = vunpack.c.l.b16 %v743
        %v824 = vunpack.c.l.b16 %v744
        %v825 = vunpack.c.l.b16 %v745
        %v826 = vpack.c.b16 %v811, %v810
        %v827 = vpack.c.b16 %v813, %v812
        %v828 = vpack.c.b16 %v815, %v814
        %v829 = vpack.c.b16 %v817, %v816
        %v830 = vpack.c.b16 %v819, %v818
        %v831 = vpack.c.b16 %v821, %v820
        %v832 = vpack.c.b16 %v823, %v822
        %v833 = vpack.c.b16 %v825, %v824
        %842 = vmatprep.subr.bf16.mxu0 0
        %843 = vmatpush1.bf16.msra.mxu0 %v833
        %844 = vmatprep.subr.bf16.mxu0 0
        %845 = vmatpush1.bf16.msra.mxu0 %v832
        %846 = vmatprep.subr.bf16.mxu0 0
        %847 = vmatpush1.bf16.msra.mxu0 %v831
        %848 = vmatprep.subr.bf16.mxu0 0
        %849 = vmatpush1.bf16.msra.mxu0 %v830
        %850 = vmatprep.subr.bf16.mxu0 0
        %851 = vmatpush1.bf16.msra.mxu0 %v829
        %852 = vmatprep.subr.bf16.mxu0 0
        %853 = vmatpush1.bf16.msra.mxu0 %v828
        %854 = vmatprep.subr.bf16.mxu0 0
        %855 = vmatpush1.bf16.msra.mxu0 %v827
        %856 = vmatprep.subr.bf16.mxu0 0
        %857 = vmatpush1.bf16.msra.mxu0 %v826
        %858 = vmatprep.subr.bf16.mxu0 0
        %859 = vmatpush2.bf16.msra.mxu0 0
        %860 = vmatprep.subr.bf16.mxu0 0
        %861 = vmatpush2.bf16.msra.mxu0 0
        %862 = vmatprep.subr.bf16.mxu0 0
        %863 = vmatpush2.bf16.msra.mxu0 0
        %864 = vmatprep.subr.bf16.mxu0 0
        %865 = vmatpush2.bf16.msra.mxu0 0
        %866 = vmatprep.subr.bf16.mxu0 0
        %867 = vmatpush2.bf16.msra.mxu0 0
        %868 = vmatprep.subr.bf16.mxu0 0
        %869 = vmatpush2.bf16.msra.mxu0 0
        %870 = vmatprep.subr.bf16.mxu0 0
        %871 = vmatpush2.bf16.msra.mxu0 0
        %872 = vmatprep.subr.bf16.mxu0 0
        %873 = vmatpush2.bf16.msra.mxu0 0
        %874 = vmatprep.mubr.bf16.mxu0 0
        %875 = vmatmul.mubr.bf16.gmra.mxu0 %v778
        %v876 = vpop.f32.mrf.mxu0
        %v877 = vadd.f32 0.0, %v876
        %v878 = vpop.f32.mrf.mxu0
        %v879 = vpop.f32.mrf.mxu0
        %v880 = vadd.f32 0.0, %v879
        %v881 = vpop.f32.mrf.mxu0
        %882 = vmatprep.mubr.bf16.mxu0 0
        %883 = vmatmul.mubr.bf16.gmra.mxu0 %v779
        %v884 = vpop.f32.mrf.mxu0
        %v885 = vadd.f32 0.0, %v884
        %v886 = vpop.f32.mrf.mxu0
        %v887 = vpop.f32.mrf.mxu0
        %v888 = vadd.f32 0.0, %v887
        %v889 = vpop.f32.mrf.mxu0
        %890 = vmatprep.mubr.bf16.mxu0 0
        %891 = vmatmul.mubr.bf16.gmra.mxu0 %v780
        %v892 = vpop.f32.mrf.mxu0
        %v893 = vadd.f32 0.0, %v892
        %v894 = vpop.f32.mrf.mxu0
        %v895 = vpop.f32.mrf.mxu0
        %v896 = vadd.f32 0.0, %v895
        %v897 = vpop.f32.mrf.mxu0
        %898 = vmatprep.mubr.bf16.mxu0 0
        %899 = vmatmul.mubr.bf16.gmra.mxu0 %v781
        %v900 = vpop.f32.mrf.mxu0
        %v901 = vadd.f32 0.0, %v900
        %v902 = vpop.f32.mrf.mxu0
        %v903 = vpop.f32.mrf.mxu0
        %v904 = vadd.f32 0.0, %v903
        %v905 = vpop.f32.mrf.mxu0
        %906 = vmatprep.mubr.bf16.mxu0 0
        %907 = vmatmul.mubr.bf16.gmra.mxu0 %v782
        %v908 = vpop.f32.mrf.mxu0
        %v909 = vadd.f32 0.0, %v908
        %v910 = vpop.f32.mrf.mxu0
        %v911 = vpop.f32.mrf.mxu0
        %v912 = vadd.f32 0.0, %v911
        %v913 = vpop.f32.mrf.mxu0
        %914 = vmatprep.mubr.bf16.mxu0 0
        %915 = vmatmul.mubr.bf16.gmra.mxu0 %v783
        %v916 = vpop.f32.mrf.mxu0
        %v917 = vadd.f32 0.0, %v916
        %v918 = vpop.f32.mrf.mxu0
        %v919 = vpop.f32.mrf.mxu0
        %v920 = vadd.f32 0.0, %v919
        %v921 = vpop.f32.mrf.mxu0
        %922 = vmatprep.mubr.bf16.mxu0 0
        %923 = vmatmul.mubr.bf16.gmra.mxu0 %v784
        %v924 = vpop.f32.mrf.mxu0
        %v925 = vadd.f32 0.0, %v924
        %v926 = vpop.f32.mrf.mxu0
        %v927 = vpop.f32.mrf.mxu0
        %v928 = vadd.f32 0.0, %v927
        %v929 = vpop.f32.mrf.mxu0
        %930 = vmatprep.mubr.bf16.mxu0 0
        %931 = vmatmul.mubr.bf16.gmra.mxu0 %v785
        %v932 = vpop.f32.mrf.mxu0
        %v933 = vadd.f32 0.0, %v932
        %v934 = vpop.f32.mrf.mxu0
        %v935 = vpop.f32.mrf.mxu0
        %v936 = vadd.f32 0.0, %v935
        %v937 = vpop.f32.mrf.mxu0
        %938 = vdwg.mxu0
        %v939 = vld [vmem:[%s215] sm:$0xff]
        %v940 = vld [vmem:[%s215 + $0x8] sm:$0xff]
        %v941 = vld [vmem:[%s215 + $0x10] sm:$0xff]
        %v942 = vld [vmem:[%s215 + $0x18] sm:$0xff]
        %v943 = vld [vmem:[%s215 + $0x20] sm:$0xff]
        %v944 = vld [vmem:[%s215 + $0x28] sm:$0xff]
        %v945 = vld [vmem:[%s215 + $0x30] sm:$0xff]
        %v946 = vld [vmem:[%s215 + $0x38] sm:$0xff]
        %v947 = vld [vmem:[%s215 + $0x40] sm:$0xff]
        %v948 = vld [vmem:[%s215 + $0x48] sm:$0xff]
        %v949 = vld [vmem:[%s215 + $0x50] sm:$0xff]
        %v950 = vld [vmem:[%s215 + $0x58] sm:$0xff]
        %v951 = vld [vmem:[%s215 + $0x60] sm:$0xff]
        %v952 = vld [vmem:[%s215 + $0x68] sm:$0xff]
        %v953 = vld [vmem:[%s215 + $0x70] sm:$0xff]
        %v954 = vld [vmem:[%s215 + $0x78] sm:$0xff]
        %v955 = vld [vmem:[%s218] sm:$0x1]
        %v957 = vlaneseq
        %v958 = vshrl.u32 %v957, 7
        %v959 = vsub.s32 0, %v958
        %v960 = vrot.slane %v955, %v959
        %962 = vmatprep.subr.mxu0 0.0
        %963 = vmatpush1.msra.mxu0 %v954
        %964 = vmatprep.subr.mxu0 0.0
        %965 = vmatpush1.msra.mxu0 %v953
        %966 = vmatprep.subr.mxu0 0.0
        %967 = vmatpush1.msra.mxu0 %v952
        %968 = vmatprep.subr.mxu0 0.0
        %969 = vmatpush1.msra.mxu0 %v951
        %970 = vmatprep.subr.mxu0 0.0
        %971 = vmatpush1.msra.mxu0 %v950
        %972 = vmatprep.subr.mxu0 0.0
        %973 = vmatpush1.msra.mxu0 %v949
        %974 = vmatprep.subr.mxu0 0.0
        %975 = vmatpush1.msra.mxu0 %v948
        %976 = vmatprep.subr.mxu0 0.0
        %977 = vmatpush1.msra.mxu0 %v947
        %978 = vmatprep.subr.mxu0 0.0
        %979 = vmatpush1.msra.mxu0 %v946
        %980 = vmatprep.subr.mxu0 0.0
        %981 = vmatpush1.msra.mxu0 %v945
        %982 = vmatprep.subr.mxu0 0.0
        %983 = vmatpush1.msra.mxu0 %v944
        %984 = vmatprep.subr.mxu0 0.0
        %985 = vmatpush1.msra.mxu0 %v943
        %986 = vmatprep.subr.mxu0 0.0
        %987 = vmatpush1.msra.mxu0 %v942
        %988 = vmatprep.subr.mxu0 0.0
        %989 = vmatpush1.msra.mxu0 %v941
        %990 = vmatprep.subr.mxu0 0.0
        %991 = vmatpush1.msra.mxu0 %v940
        %992 = vmatprep.subr.mxu0 0.0
        %993 = vmatpush1.msra.mxu0 %v939
        %994 = vmatprep.subr.mxu0 0.0
        %995 = vmatpush2.msra.mxu0 0.0
        %996 = vmatprep.subr.mxu0 0.0
        %997 = vmatpush2.msra.mxu0 0.0
        %998 = vmatprep.subr.mxu0 0.0
        %999 = vmatpush2.msra.mxu0 0.0
        %1000 = vmatprep.subr.mxu0 0.0
        %1001 = vmatpush2.msra.mxu0 0.0
        %1002 = vmatprep.subr.mxu0 0.0
        %1003 = vmatpush2.msra.mxu0 0.0
        %1004 = vmatprep.subr.mxu0 0.0
        %1005 = vmatpush2.msra.mxu0 0.0
        %1006 = vmatprep.subr.mxu0 0.0
        %1007 = vmatpush2.msra.mxu0 0.0
        %1008 = vmatprep.subr.mxu0 0.0
        %1009 = vmatpush2.msra.mxu0 0.0
        %1010 = vmatprep.subr.mxu0 0.0
        %1011 = vmatpush2.msra.mxu0 0.0
        %1012 = vmatprep.subr.mxu0 0.0
        %1013 = vmatpush2.msra.mxu0 0.0
        %1014 = vmatprep.subr.mxu0 0.0
        %1015 = vmatpush2.msra.mxu0 0.0
        %1016 = vmatprep.subr.mxu0 0.0
        %1017 = vmatpush2.msra.mxu0 0.0
        %1018 = vmatprep.subr.mxu0 0.0
        %1019 = vmatpush2.msra.mxu0 0.0
        %1020 = vmatprep.subr.mxu0 0.0
        %1021 = vmatpush2.msra.mxu0 0.0
        %1022 = vmatprep.subr.mxu0 0.0
        %1023 = vmatpush2.msra.mxu0 0.0
        %1024 = vmatprep.subr.mxu0 0.0
        %1025 = vmatpush2.msra.mxu0 0.0
        %1026 = vmatprep.mubr.f32.mxu0 0.0
        %1027 = vmatmul.mubr.f32.gmra.mxu0 %v877
        %v1028 = vpop.f32.mrf.mxu0
        %v1029 = vadd.f32 %v960, %v1028
        %v1030 = vpop.f32.mrf.mxu0
        %1031 = vmatprep.mubr.f32.mxu0 0.0
        %1032 = vmatmul.mubr.f32.gmra.mxu0 %v880
        %v1033 = vpop.f32.mrf.mxu0
        %v1034 = vadd.f32 %v960, %v1033
        %v1035 = vpop.f32.mrf.mxu0
        %1036 = vmatprep.mubr.f32.mxu0 0.0
        %1037 = vmatmul.mubr.f32.gmra.mxu0 %v885
        %v1038 = vpop.f32.mrf.mxu0
        %v1039 = vadd.f32 %v960, %v1038
        %v1040 = vpop.f32.mrf.mxu0
        %1041 = vmatprep.mubr.f32.mxu0 0.0
        %1042 = vmatmul.mubr.f32.gmra.mxu0 %v888
        %v1043 = vpop.f32.mrf.mxu0
        %v1044 = vadd.f32 %v960, %v1043
        %v1045 = vpop.f32.mrf.mxu0
        %1046 = vmatprep.mubr.f32.mxu0 0.0
        %1047 = vmatmul.mubr.f32.gmra.mxu0 %v893
        %v1048 = vpop.f32.mrf.mxu0
        %v1049 = vadd.f32 %v960, %v1048
        %v1050 = vpop.f32.mrf.mxu0
        %1051 = vmatprep.mubr.f32.mxu0 0.0
        %1052 = vmatmul.mubr.f32.gmra.mxu0 %v896
        %v1053 = vpop.f32.mrf.mxu0
        %v1054 = vadd.f32 %v960, %v1053
        %v1055 = vpop.f32.mrf.mxu0
        %1056 = vmatprep.mubr.f32.mxu0 0.0
        %1057 = vmatmul.mubr.f32.gmra.mxu0 %v901
        %v1058 = vpop.f32.mrf.mxu0
        %v1059 = vadd.f32 %v960, %v1058
        %v1060 = vpop.f32.mrf.mxu0
        %1061 = vmatprep.mubr.f32.mxu0 0.0
        %1062 = vmatmul.mubr.f32.gmra.mxu0 %v904
        %v1063 = vpop.f32.mrf.mxu0
        %v1064 = vadd.f32 %v960, %v1063
        %v1065 = vpop.f32.mrf.mxu0
        %1066 = vmatprep.mubr.f32.mxu0 0.0
        %1067 = vmatmul.mubr.f32.gmra.mxu0 %v909
        %v1068 = vpop.f32.mrf.mxu0
        %v1069 = vadd.f32 %v960, %v1068
        %v1070 = vpop.f32.mrf.mxu0
        %1071 = vmatprep.mubr.f32.mxu0 0.0
        %1072 = vmatmul.mubr.f32.gmra.mxu0 %v912
        %v1073 = vpop.f32.mrf.mxu0
        %v1074 = vadd.f32 %v960, %v1073
        %v1075 = vpop.f32.mrf.mxu0
        %1076 = vmatprep.mubr.f32.mxu0 0.0
        %1077 = vmatmul.mubr.f32.gmra.mxu0 %v917
        %v1078 = vpop.f32.mrf.mxu0
        %v1079 = vadd.f32 %v960, %v1078
        %v1080 = vpop.f32.mrf.mxu0
        %1081 = vmatprep.mubr.f32.mxu0 0.0
        %1082 = vmatmul.mubr.f32.gmra.mxu0 %v920
        %v1083 = vpop.f32.mrf.mxu0
        %v1084 = vadd.f32 %v960, %v1083
        %v1085 = vpop.f32.mrf.mxu0
        %1086 = vmatprep.mubr.f32.mxu0 0.0
        %1087 = vmatmul.mubr.f32.gmra.mxu0 %v925
        %v1088 = vpop.f32.mrf.mxu0
        %v1089 = vadd.f32 %v960, %v1088
        %v1090 = vpop.f32.mrf.mxu0
        %1091 = vmatprep.mubr.f32.mxu0 0.0
        %1092 = vmatmul.mubr.f32.gmra.mxu0 %v928
        %v1093 = vpop.f32.mrf.mxu0
        %v1094 = vadd.f32 %v960, %v1093
        %v1095 = vpop.f32.mrf.mxu0
        %1096 = vmatprep.mubr.f32.mxu0 0.0
        %1097 = vmatmul.mubr.f32.gmra.mxu0 %v933
        %v1098 = vpop.f32.mrf.mxu0
        %v1099 = vadd.f32 %v960, %v1098
        %v1100 = vpop.f32.mrf.mxu0
        %1101 = vmatprep.mubr.f32.mxu0 0.0
        %1102 = vmatmul.mubr.f32.gmra.mxu0 %v936
        %v1103 = vpop.f32.mrf.mxu0
        %v1104 = vadd.f32 %v960, %v1103
        %v1105 = vpop.f32.mrf.mxu0
        %1106 = vdwg.mxu0
        %v1107 = vmax.f32 %v1029, 0.0
        %v1108 = vmax.f32 %v1034, 0.0
        %v1109 = vmax.f32 %v1039, 0.0
        %v1110 = vmax.f32 %v1044, 0.0
        %v1111 = vmax.f32 %v1049, 0.0
        %v1112 = vmax.f32 %v1054, 0.0
        %v1113 = vmax.f32 %v1059, 0.0
        %v1114 = vmax.f32 %v1064, 0.0
        %v1115 = vmax.f32 %v1069, 0.0
        %v1116 = vmax.f32 %v1074, 0.0
        %v1117 = vmax.f32 %v1079, 0.0
        %v1118 = vmax.f32 %v1084, 0.0
        %v1119 = vmax.f32 %v1089, 0.0
        %v1120 = vmax.f32 %v1094, 0.0
        %v1121 = vmax.f32 %v1099, 0.0
        %v1122 = vmax.f32 %v1104, 0.0
        %v1123 = vpack.c.bf16 %v1108, %v1107
        %v1124 = vpack.c.bf16 %v1110, %v1109
        %v1125 = vpack.c.bf16 %v1112, %v1111
        %v1126 = vpack.c.bf16 %v1114, %v1113
        %v1127 = vpack.c.bf16 %v1116, %v1115
        %v1128 = vpack.c.bf16 %v1118, %v1117
        %v1129 = vpack.c.bf16 %v1120, %v1119
        %v1130 = vpack.c.bf16 %v1122, %v1121
        %v1139 = vunpack.c.l.b16 %v1123
        %v1140 = vunpack.c.h.b16 %v1123
        %v1141 = vunpack.c.l.b16 %v1124
        %v1142 = vunpack.c.h.b16 %v1124
        %v1143 = vunpack.c.l.b16 %v1125
        %v1144 = vunpack.c.h.b16 %v1125
        %v1145 = vunpack.c.l.b16 %v1126
        %v1146 = vunpack.c.h.b16 %v1126
        %v1147 = vunpack.c.l.b16 %v1127
        %v1148 = vunpack.c.h.b16 %v1127
        %v1149 = vunpack.c.l.b16 %v1128
        %v1150 = vunpack.c.h.b16 %v1128
        %v1151 = vunpack.c.l.b16 %v1129
        %v1152 = vunpack.c.h.b16 %v1129
        %v1153 = vunpack.c.l.b16 %v1130
        %v1154 = vunpack.c.h.b16 %v1130
        %v1155 = vpack.c.b16 %v1139, %v1139
        %v1156 = vpack.c.b16 %v1140, %v1140
        %v1157 = vpack.c.b16 %v1141, %v1141
        %v1158 = vpack.c.b16 %v1142, %v1142
        %v1159 = vpack.c.b16 %v1143, %v1143
        %v1160 = vpack.c.b16 %v1144, %v1144
        %v1161 = vpack.c.b16 %v1145, %v1145
        %v1162 = vpack.c.b16 %v1146, %v1146
        %v1163 = vpack.c.b16 %v1147, %v1147
        %v1164 = vpack.c.b16 %v1148, %v1148
        %v1165 = vpack.c.b16 %v1149, %v1149
        %v1166 = vpack.c.b16 %v1150, %v1150
        %v1167 = vpack.c.b16 %v1151, %v1151
        %v1168 = vpack.c.b16 %v1152, %v1152
        %v1169 = vpack.c.b16 %v1153, %v1153
        %v1170 = vpack.c.b16 %v1154, %v1154
        %s1187 = smul.addr %s227, 4
        %s1188 = scalar_lea.vmem [#allocation3], %s1187
        %1189 = vst [vmem:[%s1188] sm:$0xf] %v1155
        %1190 = vst [vmem:[%s1188 + $0x4] sm:$0xf] %v1156
        %1191 = vst [vmem:[%s1188 + $0x8] sm:$0xf] %v1157
        %1192 = vst [vmem:[%s1188 + $0xc] sm:$0xf] %v1158
        %1193 = vst [vmem:[%s1188 + $0x10] sm:$0xf] %v1159
        %1194 = vst [vmem:[%s1188 + $0x14] sm:$0xf] %v1160
        %1195 = vst [vmem:[%s1188 + $0x18] sm:$0xf] %v1161
        %1196 = vst [vmem:[%s1188 + $0x1c] sm:$0xf] %v1162
        %1197 = vst [vmem:[%s1188 + $0x20] sm:$0xf] %v1163
        %1198 = vst [vmem:[%s1188 + $0x24] sm:$0xf] %v1164
        %1199 = vst [vmem:[%s1188 + $0x28] sm:$0xf] %v1165
        %1200 = vst [vmem:[%s1188 + $0x2c] sm:$0xf] %v1166
        %1201 = vst [vmem:[%s1188 + $0x30] sm:$0xf] %v1167
        %1202 = vst [vmem:[%s1188 + $0x34] sm:$0xf] %v1168
        %1203 = vst [vmem:[%s1188 + $0x38] sm:$0xf] %v1169
        %1204 = vst [vmem:[%s1188 + $0x3c] sm:$0xf] %v1170
      $region44: #{gcn_forward.1} parent=35 // pred_fallthru
        _
      %p1205 = scmp.eq.s32.totalorder %s19, 2
      // Predicated region
      $region45: #{gcn_forward.1} parent=35 // pred_check
        %p1206 = pneg %p1205
      $region46: #{gcn_forward.1} parent=35 // pred_check_branch
        %1208 = sbr.rel (%p1206) target = $region48
      $region47: #{gcn_forward.1} parent=35 // pred_region
        %v1209 = vld [vmem:[#allocation3] sm:$0xf]
        %v1210 = vld [vmem:[#allocation3 + $0x4] sm:$0xf]
        %v1211 = vld [vmem:[#allocation3 + $0x8] sm:$0xf]
        %v1212 = vld [vmem:[#allocation3 + $0xc] sm:$0xf]
        %v1213 = vld [vmem:[#allocation3 + $0x10] sm:$0xf]
        %v1214 = vld [vmem:[#allocation3 + $0x14] sm:$0xf]
        %v1215 = vld [vmem:[#allocation3 + $0x18] sm:$0xf]
        %v1216 = vld [vmem:[#allocation3 + $0x1c] sm:$0xf]
        %v1217 = vld [vmem:[#allocation3 + $0x20] sm:$0xf]
        %v1218 = vld [vmem:[#allocation3 + $0x24] sm:$0xf]
        %v1219 = vld [vmem:[#allocation3 + $0x28] sm:$0xf]
        %v1220 = vld [vmem:[#allocation3 + $0x2c] sm:$0xf]
        %v1221 = vld [vmem:[#allocation3 + $0x30] sm:$0xf]
        %v1222 = vld [vmem:[#allocation3 + $0x34] sm:$0xf]
        %v1223 = vld [vmem:[#allocation3 + $0x38] sm:$0xf]
        %v1224 = vld [vmem:[#allocation3 + $0x3c] sm:$0xf]
        %v1241 = vunpack.c.l.b16 %v231
        %v1242 = vunpack.c.l.b16 %v232
        %v1243 = vunpack.c.l.b16 %v233
        %v1244 = vunpack.c.l.b16 %v234
        %v1245 = vunpack.c.l.b16 %v235
        %v1246 = vunpack.c.l.b16 %v236
        %v1247 = vunpack.c.l.b16 %v237
        %v1248 = vunpack.c.l.b16 %v238
        %v1249 = vunpack.c.l.b16 %v239
        %v1250 = vunpack.c.l.b16 %v240
        %v1251 = vunpack.c.l.b16 %v241
        %v1252 = vunpack.c.l.b16 %v242
        %v1253 = vunpack.c.l.b16 %v243
        %v1254 = vunpack.c.l.b16 %v244
        %v1255 = vunpack.c.l.b16 %v245
        %v1256 = vunpack.c.l.b16 %v246
        %v1257 = vpack.c.b16 %v1242, %v1241
        %v1258 = vpack.c.b16 %v1244, %v1243
        %v1259 = vpack.c.b16 %v1246, %v1245
        %v1260 = vpack.c.b16 %v1248, %v1247
        %v1261 = vpack.c.b16 %v1250, %v1249
        %v1262 = vpack.c.b16 %v1252, %v1251
        %v1263 = vpack.c.b16 %v1254, %v1253
        %v1264 = vpack.c.b16 %v1256, %v1255
        %v1289 = vunpack.c.l.b16 %v1209
        %v1290 = vunpack.c.l.b16 %v1210
        %v1291 = vunpack.c.l.b16 %v1211
        %v1292 = vunpack.c.l.b16 %v1212
        %v1293 = vunpack.c.l.b16 %v1213
        %v1294 = vunpack.c.l.b16 %v1214
        %v1295 = vunpack.c.l.b16 %v1215
        %v1296 = vunpack.c.l.b16 %v1216
        %v1297 = vunpack.c.l.b16 %v1217
        %v1298 = vunpack.c.l.b16 %v1218
        %v1299 = vunpack.c.l.b16 %v1219
        %v1300 = vunpack.c.l.b16 %v1220
        %v1301 = vunpack.c.l.b16 %v1221
        %v1302 = vunpack.c.l.b16 %v1222
        %v1303 = vunpack.c.l.b16 %v1223
        %v1304 = vunpack.c.l.b16 %v1224
        %v1305 = vpack.c.b16 %v1290, %v1289
        %v1306 = vpack.c.b16 %v1292, %v1291
        %v1307 = vpack.c.b16 %v1294, %v1293
        %v1308 = vpack.c.b16 %v1296, %v1295
        %v1309 = vpack.c.b16 %v1298, %v1297
        %v1310 = vpack.c.b16 %v1300, %v1299
        %v1311 = vpack.c.b16 %v1302, %v1301
        %v1312 = vpack.c.b16 %v1304, %v1303
        %1321 = vmatprep.subr.bf16.mxu0 0
        %1322 = vmatpush1.bf16.msra.mxu0 %v1312
        %1323 = vmatprep.subr.bf16.mxu0 0
        %1324 = vmatpush1.bf16.msra.mxu0 %v1311
        %1325 = vmatprep.subr.bf16.mxu0 0
        %1326 = vmatpush1.bf16.msra.mxu0 %v1310
        %1327 = vmatprep.subr.bf16.mxu0 0
        %1328 = vmatpush1.bf16.msra.mxu0 %v1309
        %1329 = vmatprep.subr.bf16.mxu0 0
        %1330 = vmatpush1.bf16.msra.mxu0 %v1308
        %1331 = vmatprep.subr.bf16.mxu0 0
        %1332 = vmatpush1.bf16.msra.mxu0 %v1307
        %1333 = vmatprep.subr.bf16.mxu0 0
        %1334 = vmatpush1.bf16.msra.mxu0 %v1306
        %1335 = vmatprep.subr.bf16.mxu0 0
        %1336 = vmatpush1.bf16.msra.mxu0 %v1305
        %1337 = vmatprep.subr.bf16.mxu0 0
        %1338 = vmatpush2.bf16.msra.mxu0 0
        %1339 = vmatprep.subr.bf16.mxu0 0
        %1340 = vmatpush2.bf16.msra.mxu0 0
        %1341 = vmatprep.subr.bf16.mxu0 0
        %1342 = vmatpush2.bf16.msra.mxu0 0
        %1343 = vmatprep.subr.bf16.mxu0 0
        %1344 = vmatpush2.bf16.msra.mxu0 0
        %1345 = vmatprep.subr.bf16.mxu0 0
        %1346 = vmatpush2.bf16.msra.mxu0 0
        %1347 = vmatprep.subr.bf16.mxu0 0
        %1348 = vmatpush2.bf16.msra.mxu0 0
        %1349 = vmatprep.subr.bf16.mxu0 0
        %1350 = vmatpush2.bf16.msra.mxu0 0
        %1351 = vmatprep.subr.bf16.mxu0 0
        %1352 = vmatpush2.bf16.msra.mxu0 0
        %1353 = vmatprep.mubr.bf16.mxu0 0
        %1354 = vmatmul.mubr.bf16.gmra.mxu0 %v1257
        %v1355 = vpop.f32.mrf.mxu0
        %v1356 = vadd.f32 0.0, %v1355
        %v1357 = vpop.f32.mrf.mxu0
        %v1358 = vpop.f32.mrf.mxu0
        %v1359 = vadd.f32 0.0, %v1358
        %v1360 = vpop.f32.mrf.mxu0
        %1361 = vmatprep.mubr.bf16.mxu0 0
        %1362 = vmatmul.mubr.bf16.gmra.mxu0 %v1258
        %v1363 = vpop.f32.mrf.mxu0
        %v1364 = vadd.f32 0.0, %v1363
        %v1365 = vpop.f32.mrf.mxu0
        %v1366 = vpop.f32.mrf.mxu0
        %v1367 = vadd.f32 0.0, %v1366
        %v1368 = vpop.f32.mrf.mxu0
        %1369 = vmatprep.mubr.bf16.mxu0 0
        %1370 = vmatmul.mubr.bf16.gmra.mxu0 %v1259
        %v1371 = vpop.f32.mrf.mxu0
        %v1372 = vadd.f32 0.0, %v1371
        %v1373 = vpop.f32.mrf.mxu0
        %v1374 = vpop.f32.mrf.mxu0
        %v1375 = vadd.f32 0.0, %v1374
        %v1376 = vpop.f32.mrf.mxu0
        %1377 = vmatprep.mubr.bf16.mxu0 0
        %1378 = vmatmul.mubr.bf16.gmra.mxu0 %v1260
        %v1379 = vpop.f32.mrf.mxu0
        %v1380 = vadd.f32 0.0, %v1379
        %v1381 = vpop.f32.mrf.mxu0
        %v1382 = vpop.f32.mrf.mxu0
        %v1383 = vadd.f32 0.0, %v1382
        %v1384 = vpop.f32.mrf.mxu0
        %1385 = vmatprep.mubr.bf16.mxu0 0
        %1386 = vmatmul.mubr.bf16.gmra.mxu0 %v1261
        %v1387 = vpop.f32.mrf.mxu0
        %v1388 = vadd.f32 0.0, %v1387
        %v1389 = vpop.f32.mrf.mxu0
        %v1390 = vpop.f32.mrf.mxu0
        %v1391 = vadd.f32 0.0, %v1390
        %v1392 = vpop.f32.mrf.mxu0
        %1393 = vmatprep.mubr.bf16.mxu0 0
        %1394 = vmatmul.mubr.bf16.gmra.mxu0 %v1262
        %v1395 = vpop.f32.mrf.mxu0
        %v1396 = vadd.f32 0.0, %v1395
        %v1397 = vpop.f32.mrf.mxu0
        %v1398 = vpop.f32.mrf.mxu0
        %v1399 = vadd.f32 0.0, %v1398
        %v1400 = vpop.f32.mrf.mxu0
        %1401 = vmatprep.mubr.bf16.mxu0 0
        %1402 = vmatmul.mubr.bf16.gmra.mxu0 %v1263
        %v1403 = vpop.f32.mrf.mxu0
        %v1404 = vadd.f32 0.0, %v1403
        %v1405 = vpop.f32.mrf.mxu0
        %v1406 = vpop.f32.mrf.mxu0
        %v1407 = vadd.f32 0.0, %v1406
        %v1408 = vpop.f32.mrf.mxu0
        %1409 = vmatprep.mubr.bf16.mxu0 0
        %1410 = vmatmul.mubr.bf16.gmra.mxu0 %v1264
        %v1411 = vpop.f32.mrf.mxu0
        %v1412 = vadd.f32 0.0, %v1411
        %v1413 = vpop.f32.mrf.mxu0
        %v1414 = vpop.f32.mrf.mxu0
        %v1415 = vadd.f32 0.0, %v1414
        %v1416 = vpop.f32.mrf.mxu0
        %1417 = vdwg.mxu0
        %v1418 = vld [vmem:[%s215] sm:$0xff]
        %v1419 = vld [vmem:[%s215 + $0x8] sm:$0xff]
        %v1420 = vld [vmem:[%s215 + $0x10] sm:$0xff]
        %v1421 = vld [vmem:[%s215 + $0x18] sm:$0xff]
        %v1422 = vld [vmem:[%s215 + $0x20] sm:$0xff]
        %v1423 = vld [vmem:[%s215 + $0x28] sm:$0xff]
        %v1424 = vld [vmem:[%s215 + $0x30] sm:$0xff]
        %v1425 = vld [vmem:[%s215 + $0x38] sm:$0xff]
        %v1426 = vld [vmem:[%s215 + $0x40] sm:$0xff]
        %v1427 = vld [vmem:[%s215 + $0x48] sm:$0xff]
        %v1428 = vld [vmem:[%s215 + $0x50] sm:$0xff]
        %v1429 = vld [vmem:[%s215 + $0x58] sm:$0xff]
        %v1430 = vld [vmem:[%s215 + $0x60] sm:$0xff]
        %v1431 = vld [vmem:[%s215 + $0x68] sm:$0xff]
        %v1432 = vld [vmem:[%s215 + $0x70] sm:$0xff]
        %v1433 = vld [vmem:[%s215 + $0x78] sm:$0xff]
        %v1434 = vld [vmem:[%s218] sm:$0x1]
        %v1436 = vlaneseq
        %v1437 = vshrl.u32 %v1436, 7
        %v1438 = vsub.s32 0, %v1437
        %v1439 = vrot.slane %v1434, %v1438
        %1441 = vmatprep.subr.mxu0 0.0
        %1442 = vmatpush1.msra.mxu0 %v1433
        %1443 = vmatprep.subr.mxu0 0.0
        %1444 = vmatpush1.msra.mxu0 %v1432
        %1445 = vmatprep.subr.mxu0 0.0
        %1446 = vmatpush1.msra.mxu0 %v1431
        %1447 = vmatprep.subr.mxu0 0.0
        %1448 = vmatpush1.msra.mxu0 %v1430
        %1449 = vmatprep.subr.mxu0 0.0
        %1450 = vmatpush1.msra.mxu0 %v1429
        %1451 = vmatprep.subr.mxu0 0.0
        %1452 = vmatpush1.msra.mxu0 %v1428
        %1453 = vmatprep.subr.mxu0 0.0
        %1454 = vmatpush1.msra.mxu0 %v1427
        %1455 = vmatprep.subr.mxu0 0.0
        %1456 = vmatpush1.msra.mxu0 %v1426
        %1457 = vmatprep.subr.mxu0 0.0
        %1458 = vmatpush1.msra.mxu0 %v1425
        %1459 = vmatprep.subr.mxu0 0.0
        %1460 = vmatpush1.msra.mxu0 %v1424
        %1461 = vmatprep.subr.mxu0 0.0
        %1462 = vmatpush1.msra.mxu0 %v1423
        %1463 = vmatprep.subr.mxu0 0.0
        %1464 = vmatpush1.msra.mxu0 %v1422
        %1465 = vmatprep.subr.mxu0 0.0
        %1466 = vmatpush1.msra.mxu0 %v1421
        %1467 = vmatprep.subr.mxu0 0.0
        %1468 = vmatpush1.msra.mxu0 %v1420
        %1469 = vmatprep.subr.mxu0 0.0
        %1470 = vmatpush1.msra.mxu0 %v1419
        %1471 = vmatprep.subr.mxu0 0.0
        %1472 = vmatpush1.msra.mxu0 %v1418
        %1473 = vmatprep.subr.mxu0 0.0
        %1474 = vmatpush2.msra.mxu0 0.0
        %1475 = vmatprep.subr.mxu0 0.0
        %1476 = vmatpush2.msra.mxu0 0.0
        %1477 = vmatprep.subr.mxu0 0.0
        %1478 = vmatpush2.msra.mxu0 0.0
        %1479 = vmatprep.subr.mxu0 0.0
        %1480 = vmatpush2.msra.mxu0 0.0
        %1481 = vmatprep.subr.mxu0 0.0
        %1482 = vmatpush2.msra.mxu0 0.0
        %1483 = vmatprep.subr.mxu0 0.0
        %1484 = vmatpush2.msra.mxu0 0.0
        %1485 = vmatprep.subr.mxu0 0.0
        %1486 = vmatpush2.msra.mxu0 0.0
        %1487 = vmatprep.subr.mxu0 0.0
        %1488 = vmatpush2.msra.mxu0 0.0
        %1489 = vmatprep.subr.mxu0 0.0
        %1490 = vmatpush2.msra.mxu0 0.0
        %1491 = vmatprep.subr.mxu0 0.0
        %1492 = vmatpush2.msra.mxu0 0.0
        %1493 = vmatprep.subr.mxu0 0.0
        %1494 = vmatpush2.msra.mxu0 0.0
        %1495 = vmatprep.subr.mxu0 0.0
        %1496 = vmatpush2.msra.mxu0 0.0
        %1497 = vmatprep.subr.mxu0 0.0
        %1498 = vmatpush2.msra.mxu0 0.0
        %1499 = vmatprep.subr.mxu0 0.0
        %1500 = vmatpush2.msra.mxu0 0.0
        %1501 = vmatprep.subr.mxu0 0.0
        %1502 = vmatpush2.msra.mxu0 0.0
        %1503 = vmatprep.subr.mxu0 0.0
        %1504 = vmatpush2.msra.mxu0 0.0
        %1505 = vmatprep.mubr.f32.mxu0 0.0
        %1506 = vmatmul.mubr.f32.gmra.mxu0 %v1356
        %v1507 = vpop.f32.mrf.mxu0
        %v1508 = vadd.f32 %v1439, %v1507
        %v1509 = vpop.f32.mrf.mxu0
        %1510 = vmatprep.mubr.f32.mxu0 0.0
        %1511 = vmatmul.mubr.f32.gmra.mxu0 %v1359
        %v1512 = vpop.f32.mrf.mxu0
        %v1513 = vadd.f32 %v1439, %v1512
        %v1514 = vpop.f32.mrf.mxu0
        %1515 = vmatprep.mubr.f32.mxu0 0.0
        %1516 = vmatmul.mubr.f32.gmra.mxu0 %v1364
        %v1517 = vpop.f32.mrf.mxu0
        %v1518 = vadd.f32 %v1439, %v1517
        %v1519 = vpop.f32.mrf.mxu0
        %1520 = vmatprep.mubr.f32.mxu0 0.0
        %1521 = vmatmul.mubr.f32.gmra.mxu0 %v1367
        %v1522 = vpop.f32.mrf.mxu0
        %v1523 = vadd.f32 %v1439, %v1522
        %v1524 = vpop.f32.mrf.mxu0
        %1525 = vmatprep.mubr.f32.mxu0 0.0
        %1526 = vmatmul.mubr.f32.gmra.mxu0 %v1372
        %v1527 = vpop.f32.mrf.mxu0
        %v1528 = vadd.f32 %v1439, %v1527
        %v1529 = vpop.f32.mrf.mxu0
        %1530 = vmatprep.mubr.f32.mxu0 0.0
        %1531 = vmatmul.mubr.f32.gmra.mxu0 %v1375
        %v1532 = vpop.f32.mrf.mxu0
        %v1533 = vadd.f32 %v1439, %v1532
        %v1534 = vpop.f32.mrf.mxu0
        %1535 = vmatprep.mubr.f32.mxu0 0.0
        %1536 = vmatmul.mubr.f32.gmra.mxu0 %v1380
        %v1537 = vpop.f32.mrf.mxu0
        %v1538 = vadd.f32 %v1439, %v1537
        %v1539 = vpop.f32.mrf.mxu0
        %1540 = vmatprep.mubr.f32.mxu0 0.0
        %1541 = vmatmul.mubr.f32.gmra.mxu0 %v1383
        %v1542 = vpop.f32.mrf.mxu0
        %v1543 = vadd.f32 %v1439, %v1542
        %v1544 = vpop.f32.mrf.mxu0
        %1545 = vmatprep.mubr.f32.mxu0 0.0
        %1546 = vmatmul.mubr.f32.gmra.mxu0 %v1388
        %v1547 = vpop.f32.mrf.mxu0
        %v1548 = vadd.f32 %v1439, %v1547
        %v1549 = vpop.f32.mrf.mxu0
        %1550 = vmatprep.mubr.f32.mxu0 0.0
        %1551 = vmatmul.mubr.f32.gmra.mxu0 %v1391
        %v1552 = vpop.f32.mrf.mxu0
        %v1553 = vadd.f32 %v1439, %v1552
        %v1554 = vpop.f32.mrf.mxu0
        %1555 = vmatprep.mubr.f32.mxu0 0.0
        %1556 = vmatmul.mubr.f32.gmra.mxu0 %v1396
        %v1557 = vpop.f32.mrf.mxu0
        %v1558 = vadd.f32 %v1439, %v1557
        %v1559 = vpop.f32.mrf.mxu0
        %1560 = vmatprep.mubr.f32.mxu0 0.0
        %1561 = vmatmul.mubr.f32.gmra.mxu0 %v1399
        %v1562 = vpop.f32.mrf.mxu0
        %v1563 = vadd.f32 %v1439, %v1562
        %v1564 = vpop.f32.mrf.mxu0
        %1565 = vmatprep.mubr.f32.mxu0 0.0
        %1566 = vmatmul.mubr.f32.gmra.mxu0 %v1404
        %v1567 = vpop.f32.mrf.mxu0
        %v1568 = vadd.f32 %v1439, %v1567
        %v1569 = vpop.f32.mrf.mxu0
        %1570 = vmatprep.mubr.f32.mxu0 0.0
        %1571 = vmatmul.mubr.f32.gmra.mxu0 %v1407
        %v1572 = vpop.f32.mrf.mxu0
        %v1573 = vadd.f32 %v1439, %v1572
        %v1574 = vpop.f32.mrf.mxu0
        %1575 = vmatprep.mubr.f32.mxu0 0.0
        %1576 = vmatmul.mubr.f32.gmra.mxu0 %v1412
        %v1577 = vpop.f32.mrf.mxu0
        %v1578 = vadd.f32 %v1439, %v1577
        %v1579 = vpop.f32.mrf.mxu0
        %1580 = vmatprep.mubr.f32.mxu0 0.0
        %1581 = vmatmul.mubr.f32.gmra.mxu0 %v1415
        %v1582 = vpop.f32.mrf.mxu0
        %v1583 = vadd.f32 %v1439, %v1582
        %v1584 = vpop.f32.mrf.mxu0
        %1585 = vdwg.mxu0
        %v1586 = vmax.f32 %v1508, 0.0
        %v1587 = vmax.f32 %v1513, 0.0
        %v1588 = vmax.f32 %v1518, 0.0
        %v1589 = vmax.f32 %v1523, 0.0
        %v1590 = vmax.f32 %v1528, 0.0
        %v1591 = vmax.f32 %v1533, 0.0
        %v1592 = vmax.f32 %v1538, 0.0
        %v1593 = vmax.f32 %v1543, 0.0
        %v1594 = vmax.f32 %v1548, 0.0
        %v1595 = vmax.f32 %v1553, 0.0
        %v1596 = vmax.f32 %v1558, 0.0
        %v1597 = vmax.f32 %v1563, 0.0
        %v1598 = vmax.f32 %v1568, 0.0
        %v1599 = vmax.f32 %v1573, 0.0
        %v1600 = vmax.f32 %v1578, 0.0
        %v1601 = vmax.f32 %v1583, 0.0
        %v1602 = vpack.c.bf16 %v1587, %v1586
        %v1603 = vpack.c.bf16 %v1589, %v1588
        %v1604 = vpack.c.bf16 %v1591, %v1590
        %v1605 = vpack.c.bf16 %v1593, %v1592
        %v1606 = vpack.c.bf16 %v1595, %v1594
        %v1607 = vpack.c.bf16 %v1597, %v1596
        %v1608 = vpack.c.bf16 %v1599, %v1598
        %v1609 = vpack.c.bf16 %v1601, %v1600
        %v1618 = vunpack.c.l.b16 %v1602
        %v1619 = vunpack.c.h.b16 %v1602
        %v1620 = vunpack.c.l.b16 %v1603
        %v1621 = vunpack.c.h.b16 %v1603
        %v1622 = vunpack.c.l.b16 %v1604
        %v1623 = vunpack.c.h.b16 %v1604
        %v1624 = vunpack.c.l.b16 %v1605
        %v1625 = vunpack.c.h.b16 %v1605
        %v1626 = vunpack.c.l.b16 %v1606
        %v1627 = vunpack.c.h.b16 %v1606
        %v1628 = vunpack.c.l.b16 %v1607
        %v1629 = vunpack.c.h.b16 %v1607
        %v1630 = vunpack.c.l.b16 %v1608
        %v1631 = vunpack.c.h.b16 %v1608
        %v1632 = vunpack.c.l.b16 %v1609
        %v1633 = vunpack.c.h.b16 %v1609
        %v1634 = vpack.c.b16 %v1618, %v1618
        %v1635 = vpack.c.b16 %v1619, %v1619
        %v1636 = vpack.c.b16 %v1620, %v1620
        %v1637 = vpack.c.b16 %v1621, %v1621
        %v1638 = vpack.c.b16 %v1622, %v1622
        %v1639 = vpack.c.b16 %v1623, %v1623
        %v1640 = vpack.c.b16 %v1624, %v1624
        %v1641 = vpack.c.b16 %v1625, %v1625
        %v1642 = vpack.c.b16 %v1626, %v1626
        %v1643 = vpack.c.b16 %v1627, %v1627
        %v1644 = vpack.c.b16 %v1628, %v1628
        %v1645 = vpack.c.b16 %v1629, %v1629
        %v1646 = vpack.c.b16 %v1630, %v1630
        %v1647 = vpack.c.b16 %v1631, %v1631
        %v1648 = vpack.c.b16 %v1632, %v1632
        %v1649 = vpack.c.b16 %v1633, %v1633
        %s1666 = smul.addr %s227, 4
        %s1667 = scalar_lea.vmem [#allocation2], %s1666
        %1668 = vst [vmem:[%s1667] sm:$0xf] %v1634
        %1669 = vst [vmem:[%s1667 + $0x4] sm:$0xf] %v1635
        %1670 = vst [vmem:[%s1667 + $0x8] sm:$0xf] %v1636
        %1671 = vst [vmem:[%s1667 + $0xc] sm:$0xf] %v1637
        %1672 = vst [vmem:[%s1667 + $0x10] sm:$0xf] %v1638
        %1673 = vst [vmem:[%s1667 + $0x14] sm:$0xf] %v1639
        %1674 = vst [vmem:[%s1667 + $0x18] sm:$0xf] %v1640
        %1675 = vst [vmem:[%s1667 + $0x1c] sm:$0xf] %v1641
        %1676 = vst [vmem:[%s1667 + $0x20] sm:$0xf] %v1642
        %1677 = vst [vmem:[%s1667 + $0x24] sm:$0xf] %v1643
        %1678 = vst [vmem:[%s1667 + $0x28] sm:$0xf] %v1644
        %1679 = vst [vmem:[%s1667 + $0x2c] sm:$0xf] %v1645
        %1680 = vst [vmem:[%s1667 + $0x30] sm:$0xf] %v1646
        %1681 = vst [vmem:[%s1667 + $0x34] sm:$0xf] %v1647
        %1682 = vst [vmem:[%s1667 + $0x38] sm:$0xf] %v1648
        %1683 = vst [vmem:[%s1667 + $0x3c] sm:$0xf] %v1649
      $region48: #{gcn_forward.1} parent=35 // pred_fallthru
        _
      %p1684 = scmp.eq.s32.totalorder %s19, 3
      // Predicated region
      $region49: #{gcn_forward.1} parent=35 // pred_check
        %p1685 = pneg %p1684
      $region50: #{gcn_forward.1} parent=35 // pred_check_branch
        %1687 = sbr.rel (%p1685) target = $region52
      $region51: #{gcn_forward.1} parent=35 // pred_region
        %v1688 = vld [vmem:[#allocation2] sm:$0xf]
        %v1689 = vld [vmem:[#allocation2 + $0x4] sm:$0xf]
        %v1690 = vld [vmem:[#allocation2 + $0x8] sm:$0xf]
        %v1691 = vld [vmem:[#allocation2 + $0xc] sm:$0xf]
        %v1692 = vld [vmem:[#allocation2 + $0x10] sm:$0xf]
        %v1693 = vld [vmem:[#allocation2 + $0x14] sm:$0xf]
        %v1694 = vld [vmem:[#allocation2 + $0x18] sm:$0xf]
        %v1695 = vld [vmem:[#allocation2 + $0x1c] sm:$0xf]
        %v1696 = vld [vmem:[#allocation2 + $0x20] sm:$0xf]
        %v1697 = vld [vmem:[#allocation2 + $0x24] sm:$0xf]
        %v1698 = vld [vmem:[#allocation2 + $0x28] sm:$0xf]
        %v1699 = vld [vmem:[#allocation2 + $0x2c] sm:$0xf]
        %v1700 = vld [vmem:[#allocation2 + $0x30] sm:$0xf]
        %v1701 = vld [vmem:[#allocation2 + $0x34] sm:$0xf]
        %v1702 = vld [vmem:[#allocation2 + $0x38] sm:$0xf]
        %v1703 = vld [vmem:[#allocation2 + $0x3c] sm:$0xf]
        %v1720 = vunpack.c.l.b16 %v231
        %v1721 = vunpack.c.l.b16 %v232
        %v1722 = vunpack.c.l.b16 %v233
        %v1723 = vunpack.c.l.b16 %v234
        %v1724 = vunpack.c.l.b16 %v235
        %v1725 = vunpack.c.l.b16 %v236
        %v1726 = vunpack.c.l.b16 %v237
        %v1727 = vunpack.c.l.b16 %v238
        %v1728 = vunpack.c.l.b16 %v239
        %v1729 = vunpack.c.l.b16 %v240
        %v1730 = vunpack.c.l.b16 %v241
        %v1731 = vunpack.c.l.b16 %v242
        %v1732 = vunpack.c.l.b16 %v243
        %v1733 = vunpack.c.l.b16 %v244
        %v1734 = vunpack.c.l.b16 %v245
        %v1735 = vunpack.c.l.b16 %v246
        %v1736 = vpack.c.b16 %v1721, %v1720
        %v1737 = vpack.c.b16 %v1723, %v1722
        %v1738 = vpack.c.b16 %v1725, %v1724
        %v1739 = vpack.c.b16 %v1727, %v1726
        %v1740 = vpack.c.b16 %v1729, %v1728
        %v1741 = vpack.c.b16 %v1731, %v1730
        %v1742 = vpack.c.b16 %v1733, %v1732
        %v1743 = vpack.c.b16 %v1735, %v1734
        %v1768 = vunpack.c.l.b16 %v1688
        %v1769 = vunpack.c.l.b16 %v1689
        %v1770 = vunpack.c.l.b16 %v1690
        %v1771 = vunpack.c.l.b16 %v1691
        %v1772 = vunpack.c.l.b16 %v1692
        %v1773 = vunpack.c.l.b16 %v1693
        %v1774 = vunpack.c.l.b16 %v1694
        %v1775 = vunpack.c.l.b16 %v1695
        %v1776 = vunpack.c.l.b16 %v1696
        %v1777 = vunpack.c.l.b16 %v1697
        %v1778 = vunpack.c.l.b16 %v1698
        %v1779 = vunpack.c.l.b16 %v1699
        %v1780 = vunpack.c.l.b16 %v1700
        %v1781 = vunpack.c.l.b16 %v1701
        %v1782 = vunpack.c.l.b16 %v1702
        %v1783 = vunpack.c.l.b16 %v1703
        %v1784 = vpack.c.b16 %v1769, %v1768
        %v1785 = vpack.c.b16 %v1771, %v1770
        %v1786 = vpack.c.b16 %v1773, %v1772
        %v1787 = vpack.c.b16 %v1775, %v1774
        %v1788 = vpack.c.b16 %v1777, %v1776
        %v1789 = vpack.c.b16 %v1779, %v1778
        %v1790 = vpack.c.b16 %v1781, %v1780
        %v1791 = vpack.c.b16 %v1783, %v1782
        %1800 = vmatprep.subr.bf16.mxu0 0
        %1801 = vmatpush1.bf16.msra.mxu0 %v1791
        %1802 = vmatprep.subr.bf16.mxu0 0
        %1803 = vmatpush1.bf16.msra.mxu0 %v1790
        %1804 = vmatprep.subr.bf16.mxu0 0
        %1805 = vmatpush1.bf16.msra.mxu0 %v1789
        %1806 = vmatprep.subr.bf16.mxu0 0
        %1807 = vmatpush1.bf16.msra.mxu0 %v1788
        %1808 = vmatprep.subr.bf16.mxu0 0
        %1809 = vmatpush1.bf16.msra.mxu0 %v1787
        %1810 = vmatprep.subr.bf16.mxu0 0
        %1811 = vmatpush1.bf16.msra.mxu0 %v1786
        %1812 = vmatprep.subr.bf16.mxu0 0
        %1813 = vmatpush1.bf16.msra.mxu0 %v1785
        %1814 = vmatprep.subr.bf16.mxu0 0
        %1815 = vmatpush1.bf16.msra.mxu0 %v1784
        %1816 = vmatprep.subr.bf16.mxu0 0
        %1817 = vmatpush2.bf16.msra.mxu0 0
        %1818 = vmatprep.subr.bf16.mxu0 0
        %1819 = vmatpush2.bf16.msra.mxu0 0
        %1820 = vmatprep.subr.bf16.mxu0 0
        %1821 = vmatpush2.bf16.msra.mxu0 0
        %1822 = vmatprep.subr.bf16.mxu0 0
        %1823 = vmatpush2.bf16.msra.mxu0 0
        %1824 = vmatprep.subr.bf16.mxu0 0
        %1825 = vmatpush2.bf16.msra.mxu0 0
        %1826 = vmatprep.subr.bf16.mxu0 0
        %1827 = vmatpush2.bf16.msra.mxu0 0
        %1828 = vmatprep.subr.bf16.mxu0 0
        %1829 = vmatpush2.bf16.msra.mxu0 0
        %1830 = vmatprep.subr.bf16.mxu0 0
        %1831 = vmatpush2.bf16.msra.mxu0 0
        %1832 = vmatprep.mubr.bf16.mxu0 0
        %1833 = vmatmul.mubr.bf16.gmra.mxu0 %v1736
        %v1834 = vpop.f32.mrf.mxu0
        %v1835 = vadd.f32 0.0, %v1834
        %v1836 = vpop.f32.mrf.mxu0
        %v1837 = vpop.f32.mrf.mxu0
        %v1838 = vadd.f32 0.0, %v1837
        %v1839 = vpop.f32.mrf.mxu0
        %1840 = vmatprep.mubr.bf16.mxu0 0
        %1841 = vmatmul.mubr.bf16.gmra.mxu0 %v1737
        %v1842 = vpop.f32.mrf.mxu0
        %v1843 = vadd.f32 0.0, %v1842
        %v1844 = vpop.f32.mrf.mxu0
        %v1845 = vpop.f32.mrf.mxu0
        %v1846 = vadd.f32 0.0, %v1845
        %v1847 = vpop.f32.mrf.mxu0
        %1848 = vmatprep.mubr.bf16.mxu0 0
        %1849 = vmatmul.mubr.bf16.gmra.mxu0 %v1738
        %v1850 = vpop.f32.mrf.mxu0
        %v1851 = vadd.f32 0.0, %v1850
        %v1852 = vpop.f32.mrf.mxu0
        %v1853 = vpop.f32.mrf.mxu0
        %v1854 = vadd.f32 0.0, %v1853
        %v1855 = vpop.f32.mrf.mxu0
        %1856 = vmatprep.mubr.bf16.mxu0 0
        %1857 = vmatmul.mubr.bf16.gmra.mxu0 %v1739
        %v1858 = vpop.f32.mrf.mxu0
        %v1859 = vadd.f32 0.0, %v1858
        %v1860 = vpop.f32.mrf.mxu0
        %v1861 = vpop.f32.mrf.mxu0
        %v1862 = vadd.f32 0.0, %v1861
        %v1863 = vpop.f32.mrf.mxu0
        %1864 = vmatprep.mubr.bf16.mxu0 0
        %1865 = vmatmul.mubr.bf16.gmra.mxu0 %v1740
        %v1866 = vpop.f32.mrf.mxu0
        %v1867 = vadd.f32 0.0, %v1866
        %v1868 = vpop.f32.mrf.mxu0
        %v1869 = vpop.f32.mrf.mxu0
        %v1870 = vadd.f32 0.0, %v1869
        %v1871 = vpop.f32.mrf.mxu0
        %1872 = vmatprep.mubr.bf16.mxu0 0
        %1873 = vmatmul.mubr.bf16.gmra.mxu0 %v1741
        %v1874 = vpop.f32.mrf.mxu0
        %v1875 = vadd.f32 0.0, %v1874
        %v1876 = vpop.f32.mrf.mxu0
        %v1877 = vpop.f32.mrf.mxu0
        %v1878 = vadd.f32 0.0, %v1877
        %v1879 = vpop.f32.mrf.mxu0
        %1880 = vmatprep.mubr.bf16.mxu0 0
        %1881 = vmatmul.mubr.bf16.gmra.mxu0 %v1742
        %v1882 = vpop.f32.mrf.mxu0
        %v1883 = vadd.f32 0.0, %v1882
        %v1884 = vpop.f32.mrf.mxu0
        %v1885 = vpop.f32.mrf.mxu0
        %v1886 = vadd.f32 0.0, %v1885
        %v1887 = vpop.f32.mrf.mxu0
        %1888 = vmatprep.mubr.bf16.mxu0 0
        %1889 = vmatmul.mubr.bf16.gmra.mxu0 %v1743
        %v1890 = vpop.f32.mrf.mxu0
        %v1891 = vadd.f32 0.0, %v1890
        %v1892 = vpop.f32.mrf.mxu0
        %v1893 = vpop.f32.mrf.mxu0
        %v1894 = vadd.f32 0.0, %v1893
        %v1895 = vpop.f32.mrf.mxu0
        %1896 = vdwg.mxu0
        %v1897 = vld [vmem:[%s215] sm:$0xff]
        %v1898 = vld [vmem:[%s215 + $0x8] sm:$0xff]
        %v1899 = vld [vmem:[%s215 + $0x10] sm:$0xff]
        %v1900 = vld [vmem:[%s215 + $0x18] sm:$0xff]
        %v1901 = vld [vmem:[%s215 + $0x20] sm:$0xff]
        %v1902 = vld [vmem:[%s215 + $0x28] sm:$0xff]
        %v1903 = vld [vmem:[%s215 + $0x30] sm:$0xff]
        %v1904 = vld [vmem:[%s215 + $0x38] sm:$0xff]
        %v1905 = vld [vmem:[%s215 + $0x40] sm:$0xff]
        %v1906 = vld [vmem:[%s215 + $0x48] sm:$0xff]
        %v1907 = vld [vmem:[%s215 + $0x50] sm:$0xff]
        %v1908 = vld [vmem:[%s215 + $0x58] sm:$0xff]
        %v1909 = vld [vmem:[%s215 + $0x60] sm:$0xff]
        %v1910 = vld [vmem:[%s215 + $0x68] sm:$0xff]
        %v1911 = vld [vmem:[%s215 + $0x70] sm:$0xff]
        %v1912 = vld [vmem:[%s215 + $0x78] sm:$0xff]
        %v1913 = vld [vmem:[%s218] sm:$0x1]
        %v1915 = vlaneseq
        %v1916 = vshrl.u32 %v1915, 7
        %v1917 = vsub.s32 0, %v1916
        %v1918 = vrot.slane %v1913, %v1917
        %1920 = vmatprep.subr.mxu0 0.0
        %1921 = vmatpush1.msra.mxu0 %v1912
        %1922 = vmatprep.subr.mxu0 0.0
        %1923 = vmatpush1.msra.mxu0 %v1911
        %1924 = vmatprep.subr.mxu0 0.0
        %1925 = vmatpush1.msra.mxu0 %v1910
        %1926 = vmatprep.subr.mxu0 0.0
        %1927 = vmatpush1.msra.mxu0 %v1909
        %1928 = vmatprep.subr.mxu0 0.0
        %1929 = vmatpush1.msra.mxu0 %v1908
        %1930 = vmatprep.subr.mxu0 0.0
        %1931 = vmatpush1.msra.mxu0 %v1907
        %1932 = vmatprep.subr.mxu0 0.0
        %1933 = vmatpush1.msra.mxu0 %v1906
        %1934 = vmatprep.subr.mxu0 0.0
        %1935 = vmatpush1.msra.mxu0 %v1905
        %1936 = vmatprep.subr.mxu0 0.0
        %1937 = vmatpush1.msra.mxu0 %v1904
        %1938 = vmatprep.subr.mxu0 0.0
        %1939 = vmatpush1.msra.mxu0 %v1903
        %1940 = vmatprep.subr.mxu0 0.0
        %1941 = vmatpush1.msra.mxu0 %v1902
        %1942 = vmatprep.subr.mxu0 0.0
        %1943 = vmatpush1.msra.mxu0 %v1901
        %1944 = vmatprep.subr.mxu0 0.0
        %1945 = vmatpush1.msra.mxu0 %v1900
        %1946 = vmatprep.subr.mxu0 0.0
        %1947 = vmatpush1.msra.mxu0 %v1899
        %1948 = vmatprep.subr.mxu0 0.0
        %1949 = vmatpush1.msra.mxu0 %v1898
        %1950 = vmatprep.subr.mxu0 0.0
        %1951 = vmatpush1.msra.mxu0 %v1897
        %1952 = vmatprep.subr.mxu0 0.0
        %1953 = vmatpush2.msra.mxu0 0.0
        %1954 = vmatprep.subr.mxu0 0.0
        %1955 = vmatpush2.msra.mxu0 0.0
        %1956 = vmatprep.subr.mxu0 0.0
        %1957 = vmatpush2.msra.mxu0 0.0
        %1958 = vmatprep.subr.mxu0 0.0
        %1959 = vmatpush2.msra.mxu0 0.0
        %1960 = vmatprep.subr.mxu0 0.0
        %1961 = vmatpush2.msra.mxu0 0.0
        %1962 = vmatprep.subr.mxu0 0.0
        %1963 = vmatpush2.msra.mxu0 0.0
        %1964 = vmatprep.subr.mxu0 0.0
        %1965 = vmatpush2.msra.mxu0 0.0
        %1966 = vmatprep.subr.mxu0 0.0
        %1967 = vmatpush2.msra.mxu0 0.0
        %1968 = vmatprep.subr.mxu0 0.0
        %1969 = vmatpush2.msra.mxu0 0.0
        %1970 = vmatprep.subr.mxu0 0.0
        %1971 = vmatpush2.msra.mxu0 0.0
        %1972 = vmatprep.subr.mxu0 0.0
        %1973 = vmatpush2.msra.mxu0 0.0
        %1974 = vmatprep.subr.mxu0 0.0
        %1975 = vmatpush2.msra.mxu0 0.0
        %1976 = vmatprep.subr.mxu0 0.0
        %1977 = vmatpush2.msra.mxu0 0.0
        %1978 = vmatprep.subr.mxu0 0.0
        %1979 = vmatpush2.msra.mxu0 0.0
        %1980 = vmatprep.subr.mxu0 0.0
        %1981 = vmatpush2.msra.mxu0 0.0
        %1982 = vmatprep.subr.mxu0 0.0
        %1983 = vmatpush2.msra.mxu0 0.0
        %1984 = vmatprep.mubr.f32.mxu0 0.0
        %1985 = vmatmul.mubr.f32.gmra.mxu0 %v1835
        %v1986 = vpop.f32.mrf.mxu0
        %v1987 = vadd.f32 %v1918, %v1986
        %v1988 = vpop.f32.mrf.mxu0
        %1989 = vmatprep.mubr.f32.mxu0 0.0
        %1990 = vmatmul.mubr.f32.gmra.mxu0 %v1838
        %v1991 = vpop.f32.mrf.mxu0
        %v1992 = vadd.f32 %v1918, %v1991
        %v1993 = vpop.f32.mrf.mxu0
        %1994 = vmatprep.mubr.f32.mxu0 0.0
        %1995 = vmatmul.mubr.f32.gmra.mxu0 %v1843
        %v1996 = vpop.f32.mrf.mxu0
        %v1997 = vadd.f32 %v1918, %v1996
        %v1998 = vpop.f32.mrf.mxu0
        %1999 = vmatprep.mubr.f32.mxu0 0.0
        %2000 = vmatmul.mubr.f32.gmra.mxu0 %v1846
        %v2001 = vpop.f32.mrf.mxu0
        %v2002 = vadd.f32 %v1918, %v2001
        %v2003 = vpop.f32.mrf.mxu0
        %2004 = vmatprep.mubr.f32.mxu0 0.0
        %2005 = vmatmul.mubr.f32.gmra.mxu0 %v1851
        %v2006 = vpop.f32.mrf.mxu0
        %v2007 = vadd.f32 %v1918, %v2006
        %v2008 = vpop.f32.mrf.mxu0
        %2009 = vmatprep.mubr.f32.mxu0 0.0
        %2010 = vmatmul.mubr.f32.gmra.mxu0 %v1854
        %v2011 = vpop.f32.mrf.mxu0
        %v2012 = vadd.f32 %v1918, %v2011
        %v2013 = vpop.f32.mrf.mxu0
        %2014 = vmatprep.mubr.f32.mxu0 0.0
        %2015 = vmatmul.mubr.f32.gmra.mxu0 %v1859
        %v2016 = vpop.f32.mrf.mxu0
        %v2017 = vadd.f32 %v1918, %v2016
        %v2018 = vpop.f32.mrf.mxu0
        %2019 = vmatprep.mubr.f32.mxu0 0.0
        %2020 = vmatmul.mubr.f32.gmra.mxu0 %v1862
        %v2021 = vpop.f32.mrf.mxu0
        %v2022 = vadd.f32 %v1918, %v2021
        %v2023 = vpop.f32.mrf.mxu0
        %2024 = vmatprep.mubr.f32.mxu0 0.0
        %2025 = vmatmul.mubr.f32.gmra.mxu0 %v1867
        %v2026 = vpop.f32.mrf.mxu0
        %v2027 = vadd.f32 %v1918, %v2026
        %v2028 = vpop.f32.mrf.mxu0
        %2029 = vmatprep.mubr.f32.mxu0 0.0
        %2030 = vmatmul.mubr.f32.gmra.mxu0 %v1870
        %v2031 = vpop.f32.mrf.mxu0
        %v2032 = vadd.f32 %v1918, %v2031
        %v2033 = vpop.f32.mrf.mxu0
        %2034 = vmatprep.mubr.f32.mxu0 0.0
        %2035 = vmatmul.mubr.f32.gmra.mxu0 %v1875
        %v2036 = vpop.f32.mrf.mxu0
        %v2037 = vadd.f32 %v1918, %v2036
        %v2038 = vpop.f32.mrf.mxu0
        %2039 = vmatprep.mubr.f32.mxu0 0.0
        %2040 = vmatmul.mubr.f32.gmra.mxu0 %v1878
        %v2041 = vpop.f32.mrf.mxu0
        %v2042 = vadd.f32 %v1918, %v2041
        %v2043 = vpop.f32.mrf.mxu0
        %2044 = vmatprep.mubr.f32.mxu0 0.0
        %2045 = vmatmul.mubr.f32.gmra.mxu0 %v1883
        %v2046 = vpop.f32.mrf.mxu0
        %v2047 = vadd.f32 %v1918, %v2046
        %v2048 = vpop.f32.mrf.mxu0
        %2049 = vmatprep.mubr.f32.mxu0 0.0
        %2050 = vmatmul.mubr.f32.gmra.mxu0 %v1886
        %v2051 = vpop.f32.mrf.mxu0
        %v2052 = vadd.f32 %v1918, %v2051
        %v2053 = vpop.f32.mrf.mxu0
        %2054 = vmatprep.mubr.f32.mxu0 0.0
        %2055 = vmatmul.mubr.f32.gmra.mxu0 %v1891
        %v2056 = vpop.f32.mrf.mxu0
        %v2057 = vadd.f32 %v1918, %v2056
        %v2058 = vpop.f32.mrf.mxu0
        %2059 = vmatprep.mubr.f32.mxu0 0.0
        %2060 = vmatmul.mubr.f32.gmra.mxu0 %v1894
        %v2061 = vpop.f32.mrf.mxu0
        %v2062 = vadd.f32 %v1918, %v2061
        %v2063 = vpop.f32.mrf.mxu0
        %2064 = vdwg.mxu0
        %v2065 = vlaneseq
        %v2066 = vand.u32 %v2065, 127
        %vm2067 = vcmp.lt.s32.totalorder %v2066, 8
        %v2068 = vsel %vm2067, %v1987, -1e+30
        %v2069 = vsel %vm2067, %v1992, -1e+30
        %v2070 = vsel %vm2067, %v1997, -1e+30
        %v2071 = vsel %vm2067, %v2002, -1e+30
        %v2072 = vsel %vm2067, %v2007, -1e+30
        %v2073 = vsel %vm2067, %v2012, -1e+30
        %v2074 = vsel %vm2067, %v2017, -1e+30
        %v2075 = vsel %vm2067, %v2022, -1e+30
        %v2076 = vsel %vm2067, %v2027, -1e+30
        %v2077 = vsel %vm2067, %v2032, -1e+30
        %v2078 = vsel %vm2067, %v2037, -1e+30
        %v2079 = vsel %vm2067, %v2042, -1e+30
        %v2080 = vsel %vm2067, %v2047, -1e+30
        %v2081 = vsel %vm2067, %v2052, -1e+30
        %v2082 = vsel %vm2067, %v2057, -1e+30
        %v2083 = vsel %vm2067, %v2062, -1e+30
        %2084 = vmax.xlane.f32.xlu0 %v2068
        %v2085 = vpop.xlane.xlu0 %2084
        %2086 = vmax.xlane.f32.xlu0 %v2069
        %v2087 = vpop.xlane.xlu0 %2086
        %2088 = vmax.xlane.f32.xlu0 %v2070
        %v2089 = vpop.xlane.xlu0 %2088
        %2090 = vmax.xlane.f32.xlu0 %v2071
        %v2091 = vpop.xlane.xlu0 %2090
        %2092 = vmax.xlane.f32.xlu0 %v2072
        %v2093 = vpop.xlane.xlu0 %2092
        %2094 = vmax.xlane.f32.xlu0 %v2073
        %v2095 = vpop.xlane.xlu0 %2094
        %2096 = vmax.xlane.f32.xlu0 %v2074
        %v2097 = vpop.xlane.xlu0 %2096
        %2098 = vmax.xlane.f32.xlu0 %v2075
        %v2099 = vpop.xlane.xlu0 %2098
        %2100 = vmax.xlane.f32.xlu0 %v2076
        %v2101 = vpop.xlane.xlu0 %2100
        %2102 = vmax.xlane.f32.xlu0 %v2077
        %v2103 = vpop.xlane.xlu0 %2102
        %2104 = vmax.xlane.f32.xlu0 %v2078
        %v2105 = vpop.xlane.xlu0 %2104
        %2106 = vmax.xlane.f32.xlu0 %v2079
        %v2107 = vpop.xlane.xlu0 %2106
        %2108 = vmax.xlane.f32.xlu0 %v2080
        %v2109 = vpop.xlane.xlu0 %2108
        %2110 = vmax.xlane.f32.xlu0 %v2081
        %v2111 = vpop.xlane.xlu0 %2110
        %2112 = vmax.xlane.f32.xlu0 %v2082
        %v2113 = vpop.xlane.xlu0 %2112
        %2114 = vmax.xlane.f32.xlu0 %v2083
        %v2115 = vpop.xlane.xlu0 %2114
        %v2116 = vsub.f32 %v2068, %v2085
        %v2117 = vsub.f32 %v2069, %v2087
        %v2118 = vsub.f32 %v2070, %v2089
        %v2119 = vsub.f32 %v2071, %v2091
        %v2120 = vsub.f32 %v2072, %v2093
        %v2121 = vsub.f32 %v2073, %v2095
        %v2122 = vsub.f32 %v2074, %v2097
        %v2123 = vsub.f32 %v2075, %v2099
        %v2124 = vsub.f32 %v2076, %v2101
        %v2125 = vsub.f32 %v2077, %v2103
        %v2126 = vsub.f32 %v2078, %v2105
        %v2127 = vsub.f32 %v2079, %v2107
        %v2128 = vsub.f32 %v2080, %v2109
        %v2129 = vsub.f32 %v2081, %v2111
        %v2130 = vsub.f32 %v2082, %v2113
        %v2131 = vsub.f32 %v2083, %v2115
        %v2132 = vmul.f32 %v2116, 1.442695
        %v2133 = vpow.pop %v2132
        %v2134 = vmul.f32 %v2117, 1.442695
        %v2135 = vpow.pop %v2134
        %v2136 = vmul.f32 %v2118, 1.442695
        %v2137 = vpow.pop %v2136
        %v2138 = vmul.f32 %v2119, 1.442695
        %v2139 = vpow.pop %v2138
        %v2140 = vmul.f32 %v2120, 1.442695
        %v2141 = vpow.pop %v2140
        %v2142 = vmul.f32 %v2121, 1.442695
        %v2143 = vpow.pop %v2142
        %v2144 = vmul.f32 %v2122, 1.442695
        %v2145 = vpow.pop %v2144
        %v2146 = vmul.f32 %v2123, 1.442695
        %v2147 = vpow.pop %v2146
        %v2148 = vmul.f32 %v2124, 1.442695
        %v2149 = vpow.pop %v2148
        %v2150 = vmul.f32 %v2125, 1.442695
        %v2151 = vpow.pop %v2150
        %v2152 = vmul.f32 %v2126, 1.442695
        %v2153 = vpow.pop %v2152
        %v2154 = vmul.f32 %v2127, 1.442695
        %v2155 = vpow.pop %v2154
        %v2156 = vmul.f32 %v2128, 1.442695
        %v2157 = vpow.pop %v2156
        %v2158 = vmul.f32 %v2129, 1.442695
        %v2159 = vpow.pop %v2158
        %v2160 = vmul.f32 %v2130, 1.442695
        %v2161 = vpow.pop %v2160
        %v2162 = vmul.f32 %v2131, 1.442695
        %v2163 = vpow.pop %v2162
        %v2164 = vsel %vm2067, %v2133, 0.0
        %v2165 = vsel %vm2067, %v2135, 0.0
        %v2166 = vsel %vm2067, %v2137, 0.0
        %v2167 = vsel %vm2067, %v2139, 0.0
        %v2168 = vsel %vm2067, %v2141, 0.0
        %v2169 = vsel %vm2067, %v2143, 0.0
        %v2170 = vsel %vm2067, %v2145, 0.0
        %v2171 = vsel %vm2067, %v2147, 0.0
        %v2172 = vsel %vm2067, %v2149, 0.0
        %v2173 = vsel %vm2067, %v2151, 0.0
        %v2174 = vsel %vm2067, %v2153, 0.0
        %v2175 = vsel %vm2067, %v2155, 0.0
        %v2176 = vsel %vm2067, %v2157, 0.0
        %v2177 = vsel %vm2067, %v2159, 0.0
        %v2178 = vsel %vm2067, %v2161, 0.0
        %v2179 = vsel %vm2067, %v2163, 0.0
        %2180 = vadd.xlane.f32.xlu0 %v2164
        %v2181 = vpop.xlane.xlu0 %2180
        %2182 = vadd.xlane.f32.xlu0 %v2165
        %v2183 = vpop.xlane.xlu0 %2182
        %2184 = vadd.xlane.f32.xlu0 %v2166
        %v2185 = vpop.xlane.xlu0 %2184
        %2186 = vadd.xlane.f32.xlu0 %v2167
        %v2187 = vpop.xlane.xlu0 %2186
        %2188 = vadd.xlane.f32.xlu0 %v2168
        %v2189 = vpop.xlane.xlu0 %2188
        %2190 = vadd.xlane.f32.xlu0 %v2169
        %v2191 = vpop.xlane.xlu0 %2190
        %2192 = vadd.xlane.f32.xlu0 %v2170
        %v2193 = vpop.xlane.xlu0 %2192
        %2194 = vadd.xlane.f32.xlu0 %v2171
        %v2195 = vpop.xlane.xlu0 %2194
        %2196 = vadd.xlane.f32.xlu0 %v2172
        %v2197 = vpop.xlane.xlu0 %2196
        %2198 = vadd.xlane.f32.xlu0 %v2173
        %v2199 = vpop.xlane.xlu0 %2198
        %2200 = vadd.xlane.f32.xlu0 %v2174
        %v2201 = vpop.xlane.xlu0 %2200
        %2202 = vadd.xlane.f32.xlu0 %v2175
        %v2203 = vpop.xlane.xlu0 %2202
        %2204 = vadd.xlane.f32.xlu0 %v2176
        %v2205 = vpop.xlane.xlu0 %2204
        %2206 = vadd.xlane.f32.xlu0 %v2177
        %v2207 = vpop.xlane.xlu0 %2206
        %2208 = vadd.xlane.f32.xlu0 %v2178
        %v2209 = vpop.xlane.xlu0 %2208
        %2210 = vadd.xlane.f32.xlu0 %v2179
        %v2211 = vpop.xlane.xlu0 %2210
        %v2212 = vlog2.pop %v2181
        %v2213 = vmul.f32 %v2212, 0.6931472
        %v2214 = vlog2.pop %v2183
        %v2215 = vmul.f32 %v2214, 0.6931472
        %v2216 = vlog2.pop %v2185
        %v2217 = vmul.f32 %v2216, 0.6931472
        %v2218 = vlog2.pop %v2187
        %v2219 = vmul.f32 %v2218, 0.6931472
        %v2220 = vlog2.pop %v2189
        %v2221 = vmul.f32 %v2220, 0.6931472
        %v2222 = vlog2.pop %v2191
        %v2223 = vmul.f32 %v2222, 0.6931472
        %v2224 = vlog2.pop %v2193
        %v2225 = vmul.f32 %v2224, 0.6931472
        %v2226 = vlog2.pop %v2195
        %v2227 = vmul.f32 %v2226, 0.6931472
        %v2228 = vlog2.pop %v2197
        %v2229 = vmul.f32 %v2228, 0.6931472
        %v2230 = vlog2.pop %v2199
        %v2231 = vmul.f32 %v2230, 0.6931472
        %v2232 = vlog2.pop %v2201
        %v2233 = vmul.f32 %v2232, 0.6931472
        %v2234 = vlog2.pop %v2203
        %v2235 = vmul.f32 %v2234, 0.6931472
        %v2236 = vlog2.pop %v2205
        %v2237 = vmul.f32 %v2236, 0.6931472
        %v2238 = vlog2.pop %v2207
        %v2239 = vmul.f32 %v2238, 0.6931472
        %v2240 = vlog2.pop %v2209
        %v2241 = vmul.f32 %v2240, 0.6931472
        %v2242 = vlog2.pop %v2211
        %v2243 = vmul.f32 %v2242, 0.6931472
        %v2244 = vsub.f32 %v1987, %v2085
        %v2245 = vsub.f32 %v1992, %v2087
        %v2246 = vsub.f32 %v1997, %v2089
        %v2247 = vsub.f32 %v2002, %v2091
        %v2248 = vsub.f32 %v2007, %v2093
        %v2249 = vsub.f32 %v2012, %v2095
        %v2250 = vsub.f32 %v2017, %v2097
        %v2251 = vsub.f32 %v2022, %v2099
        %v2252 = vsub.f32 %v2027, %v2101
        %v2253 = vsub.f32 %v2032, %v2103
        %v2254 = vsub.f32 %v2037, %v2105
        %v2255 = vsub.f32 %v2042, %v2107
        %v2256 = vsub.f32 %v2047, %v2109
        %v2257 = vsub.f32 %v2052, %v2111
        %v2258 = vsub.f32 %v2057, %v2113
        %v2259 = vsub.f32 %v2062, %v2115
        %v2260 = vsub.f32 %v2244, %v2213
        %v2261 = vsub.f32 %v2245, %v2215
        %v2262 = vsub.f32 %v2246, %v2217
        %v2263 = vsub.f32 %v2247, %v2219
        %v2264 = vsub.f32 %v2248, %v2221
        %v2265 = vsub.f32 %v2249, %v2223
        %v2266 = vsub.f32 %v2250, %v2225
        %v2267 = vsub.f32 %v2251, %v2227
        %v2268 = vsub.f32 %v2252, %v2229
        %v2269 = vsub.f32 %v2253, %v2231
        %v2270 = vsub.f32 %v2254, %v2233
        %v2271 = vsub.f32 %v2255, %v2235
        %v2272 = vsub.f32 %v2256, %v2237
        %v2273 = vsub.f32 %v2257, %v2239
        %v2274 = vsub.f32 %v2258, %v2241
        %v2275 = vsub.f32 %v2259, %v2243
        %2276 = vst [vmem:[%s223] sm:$0xff] %v2260
        %2277 = vst [vmem:[%s223 + $0x8] sm:$0xff] %v2261
        %2278 = vst [vmem:[%s223 + $0x10] sm:$0xff] %v2262
        %2279 = vst [vmem:[%s223 + $0x18] sm:$0xff] %v2263
        %2280 = vst [vmem:[%s223 + $0x20] sm:$0xff] %v2264
        %2281 = vst [vmem:[%s223 + $0x28] sm:$0xff] %v2265
        %2282 = vst [vmem:[%s223 + $0x30] sm:$0xff] %v2266
        %2283 = vst [vmem:[%s223 + $0x38] sm:$0xff] %v2267
        %2284 = vst [vmem:[%s223 + $0x40] sm:$0xff] %v2268
        %2285 = vst [vmem:[%s223 + $0x48] sm:$0xff] %v2269
        %2286 = vst [vmem:[%s223 + $0x50] sm:$0xff] %v2270
        %2287 = vst [vmem:[%s223 + $0x58] sm:$0xff] %v2271
        %2288 = vst [vmem:[%s223 + $0x60] sm:$0xff] %v2272
        %2289 = vst [vmem:[%s223 + $0x68] sm:$0xff] %v2273
        %2290 = vst [vmem:[%s223 + $0x70] sm:$0xff] %v2274
        %2291 = vst [vmem:[%s223 + $0x78] sm:$0xff] %v2275
      $region52: #{gcn_forward.1} parent=35 // pred_fallthru
        _
      %s2292 = smul.u32 16, %s20
      %p2293 = scmp.lt.s32.totalorder %s2292, 15
      %s2294 = scalar_select %p2293, %s2292, 15
      %s2295 = smul.addr %s2294, 8
      %s2296 = scalar_lea.vmem %s4, %s2295
      // Predicated region
      $region53: #{gcn_forward.1} parent=35 // pred_check
        %p2297 = pneg %p139
      $region54: #{gcn_forward.1} parent=35 // pred_check_branch
        %2299 = sbr.rel (%p2297) target = $region56
      $region55: #{gcn_forward.1} parent=35 // pred_region
        %s2300 = smul.u32 16, %s20
      $region56: #{gcn_forward.1} parent=35 // pred_fallthru
        _
      // Predicated region
      $region57: #{gcn_forward.1} parent=35 // pred_check
        %p2301 = pneg %p139
      $region58: #{gcn_forward.1} parent=35 // pred_check_branch
        %2303 = sbr.rel (%p2301) target = $region60
      $region59: #{gcn_forward.1} parent=35 // pred_region
        %s2304 = smul.u32 16, %s20
        %p2305 = scmp.lt.s32.totalorder %s2304, 15
        %s2306 = scalar_select %p2305, %s2304, 15
        %s2307 = smul.addr %s2306, 8
        %s2308 = scalar_lea.vmem %s4, %s2307
      $region60: #{gcn_forward.1} parent=35 // pred_fallthru
        _
    $region36: #{gcn_forward.1} parent=5 // pred_fallthru
      _
    %p2309 = scmp.le.s32.totalorder 2, %s10
    // Predicated region
    $region61: #{gcn_forward.1} parent=5 // pred_check
      %p2310 = pneg %p2309
    $region62: #{gcn_forward.1} parent=5 // pred_check_branch
      %2312 = sbr.rel (%p2310) target = $region64
    $region63: #{gcn_forward.1} parent=5 // pred_region
      %s2313 = ssub.s32 %s10, 2
    $region64: #{gcn_forward.1} parent=5 // pred_fallthru
      _
  $region6: #{gcn_forward.1} parent=0 // loop_footer
    %s14 = sadd.s32 1, %s10
  $region7: #{gcn_forward.1} parent=0 // loop_footer_branch
    %9 = sbr.rel target = $region3
  $region8: #{gcn_forward.1} parent=0 // loop_exit
    _

</llo_original>
